<compile_context>
chip_gen: v7x
topology: tpu7x:2x2x1
jax: 0.10.0
libtpu: 0.0.40
codegen_flags: <defaults>
</compile_context>

<pallas_src>
import functools

import jax
import jax.numpy as jnp
from jax.experimental import pallas as pl
from jax.experimental.pallas import tpu as pltpu


LANE = 128                        # pad feature dims to multiples of the lane width
_VMEM_BUDGET = 48 * 1024 * 1024   # conservative: fits v7x's 64 MiB/TC with headroom
_SUBLANE = {4: 8, 2: 16, 1: 32}   # sublane granularity by activation itemsize
_MAX_TILE_M = 1024                # big tiles amortize per-step overhead / MXU fill


def _round_up(x, m):
    return (x + m - 1) // m * m


def _mlp_fused_kernel(x_ref, w_ref, b_ref, wl_ref, bl_ref, o_ref, *, num_hidden):
    """Whole MLP on one (tm, d_pad) activation tile.

    x_ref : (tm, d_pad)            activation tile (input dtype)
    w_ref : (nh, d_pad, d_pad)     hidden-layer weights (pre-transposed, bf16)
    b_ref : (nh, 1, d_pad)         hidden-layer biases (f32)
    wl_ref: (d_pad, o_pad)         last-layer weight (pre-transposed, bf16)
    bl_ref: (1, o_pad)             last-layer bias (f32)
    o_ref : (tm, o_pad)
    MXU operands are bf16, accumulation is f32; ReLU on all but the last layer.
    """
    h = x_ref[...].astype(jnp.float32)
    for l in range(num_hidden):                     # static unroll over layers
        h = jnp.dot(h.astype(w_ref.dtype), w_ref[l],
                    preferred_element_type=jnp.float32)
        h = jnp.maximum(h + b_ref[l], 0.0)
    out = jnp.dot(h.astype(wl_ref.dtype), wl_ref[...],
                  preferred_element_type=jnp.float32) + bl_ref[...]
    o_ref[...] = out.astype(o_ref.dtype)


def init_mlp_params(key, input_dim, hidden_dim, output_dim, num_layers):
    """Deterministic init matching nn.Linear shapes: W (out, in), b (out,)."""
    h = [hidden_dim] * (num_layers - 1)
    dims_in = [input_dim] + h
    dims_out = h + [output_dim]
    params = []
    for n, k in zip(dims_in, dims_out):
        key, wk, bk = jax.random.split(key, 3)
        bound = 1.0 / (n ** 0.5)
        w = jax.random.uniform(wk, (k, n), jnp.float32, -bound, bound)
        b = jax.random.uniform(bk, (k,), jnp.float32, -bound, bound)
        params.append((w, b))
    return params


def pack_mlp_params(params, lane=LANE, weight_dtype=jnp.bfloat16):
    """Pack torch-layout (W (out,in), b (out,)) params once at init time.

    Weights are pre-transposed (no per-forward transposes) and stored bf16.
    Input/hidden features share one padded width d_pad; the OUTPUT gets its own
    (usually narrower) o_pad.  Zero padding is value-preserving: padded
    activation columns / weight rows+cols / bias lanes are all zero, so padded
    lanes stay exactly zero through every layer (ReLU(0)=0).
    Returns ((w_stack, b_stack, w_last, b_last), output_dim, num_hidden).
    """
    num_layers = len(params)
    inner_dims = [params[0][0].shape[1]]           # input_dim
    for w, _ in params[:-1]:
        inner_dims.append(w.shape[0])              # hidden widths
    d_pad = _round_up(max(inner_dims), lane)
    output_dim = params[-1][0].shape[0]
    o_pad = _round_up(output_dim, lane)

    num_hidden = num_layers - 1
    nh_blk = max(num_hidden, 1)                    # keep a non-empty stack
    w_stack = jnp.zeros((nh_blk, d_pad, d_pad), weight_dtype)
    b_stack = jnp.zeros((nh_blk, 1, d_pad), jnp.float32)
    for l, (w, b) in enumerate(params[:-1]):
        n_out, n_in = w.shape
        w_stack = w_stack.at[l, :n_in, :n_out].set(
            jnp.transpose(w).astype(weight_dtype))
        b_stack = b_stack.at[l, 0, :n_out].set(b.astype(jnp.float32))
    w_l, b_l = params[-1]
    n_out, n_in = w_l.shape
    w_last = jnp.zeros((d_pad, o_pad), weight_dtype).at[:n_in, :n_out].set(
        jnp.transpose(w_l).astype(weight_dtype))
    b_last = jnp.zeros((1, o_pad), jnp.float32).at[0, :n_out].set(
        b_l.astype(jnp.float32))
    return (w_stack, b_stack, w_last, b_last), output_dim, num_hidden


def _pick_tile_m(n_rows, d_pad, o_pad, act_itemsize, param_bytes):
    """Largest row tile that fits the per-core VMEM budget, >= 2 grid steps."""
    sub = _SUBLANE.get(act_itemsize, 8)
    # Worst-case accounting: params possibly double-buffered, in/out activation
    # tiles double-buffered, ~3 f32-wide temporaries for the unrolled chain.
    avail = _VMEM_BUDGET - 2 * param_bytes - (4 << 20)
    per_row = (2 * d_pad + 2 * o_pad) * act_itemsize + 3 * d_pad * 4
    tm = max(sub, min(_MAX_TILE_M, avail // per_row))
    tm = (tm // sub) * sub
    n_rows_pad = _round_up(max(n_rows, 1), sub)
    tm = min(tm, n_rows_pad)
    # v7x megacore: make sure the "parallel" M axis has >= 2 steps when rows
    # allow it, otherwise one TensorCore sits idle (no effect on v5e/v6e).
    if tm >= n_rows_pad and n_rows_pad >= 2 * sub:
        tm = _round_up(n_rows_pad // 2, sub)
    return tm


def _build_pallas_call(*, tm, d_pad, o_pad, nh_blk, num_hidden, out_rows,
                       out_dtype, cost, single_buffer_weights):
    def resident(shape):
        # Constant index_map => same block every grid step => stays resident in
        # VMEM; single-buffer it when supported (double buffering buys nothing
        # and doubles resident VMEM — matters most on v7x's 64 MiB/TC).
        idx = lambda i, _n=len(shape): (0,) * _n
        if single_buffer_weights:
            return pl.BlockSpec(shape, idx, pipeline_mode=pl.Buffered(1))
        return pl.BlockSpec(shape, idx)

    kernel = functools.partial(_mlp_fused_kernel, num_hidden=num_hidden)
    return pl.pallas_call(
        kernel,
        out_shape=jax.ShapeDtypeStruct((out_rows, o_pad), out_dtype),
        grid=(out_rows // tm,),
        in_specs=[
            pl.BlockSpec((tm, d_pad), lambda i: (i, 0)),   # activations
            resident((nh_blk, d_pad, d_pad)),              # hidden weights
            resident((nh_blk, 1, d_pad)),                  # hidden biases
            resident((d_pad, o_pad)),                      # last weight
            resident((1, o_pad)),                          # last bias
        ],
        out_specs=pl.BlockSpec((tm, o_pad), lambda i: (i, 0)),
        compiler_params=pltpu.CompilerParams(
            dimension_semantics=("parallel",),             # shard M over TCs (v7x)
            vmem_limit_bytes=_VMEM_BUDGET,
        ),
        cost_estimate=cost,
    )


def mlp_forward_fused(x, packed, output_dim, num_hidden):
    """x: (..., input_dim). Fused multi-layer linear(+ReLU) forward."""
    w_stack, b_stack, w_last, b_last = packed
    nh_blk, d_pad, _ = w_stack.shape
    o_pad = w_last.shape[1]

    lead_shape = x.shape[:-1]
    in_dim = x.shape[-1]
    M = 1
    for d in lead_shape:
        M *= d
    x2d = x.reshape(M, in_dim)

    act_itemsize = jnp.dtype(x.dtype).itemsize
    param_bytes = (w_stack.size * w_stack.dtype.itemsize
                   + b_stack.size * b_stack.dtype.itemsize
                   + w_last.size * w_last.dtype.itemsize
                   + b_last.size * b_last.dtype.itemsize)
    tm = _pick_tile_m(M, d_pad, o_pad, act_itemsize, param_bytes)

    if in_dim == d_pad and M > 0 and M % tm == 0:
        # Fast path: already lane/sublane aligned -> no wrapper-side padded
        # copy (saves a full extra HBM round trip of the activations).
        x_in, rows = x2d, M
    else:
        # Zero-pad once (zeros keep padded lanes exactly zero through every
        # layer); pad the row count to a whole number of tiles at the same time.
        rows = _round_up(max(M, 1), tm)
        x_in = jnp.pad(x2d, ((0, rows - M), (0, d_pad - in_dim)))

    cost = pl.CostEstimate(
        flops=2 * rows * (num_hidden * d_pad * d_pad + d_pad * o_pad),
        transcendentals=0,
        # per-operand itemsizes: activations in x.dtype, weights bf16, biases f32
        bytes_accessed=(rows * d_pad + rows * o_pad) * act_itemsize + param_bytes,
    )

    build = functools.partial(
        _build_pallas_call, tm=tm, d_pad=d_pad, o_pad=o_pad, nh_blk=nh_blk,
        num_hidden=num_hidden, out_rows=rows, out_dtype=x.dtype, cost=cost)
    try:
        out_p = build(single_buffer_weights=True)(
            x_in, w_stack, b_stack, w_last, b_last)
    except Exception:
        # pl.Buffered(1) not supported by this jax/libtpu combo: fall back to
        # default double-buffered weight specs (identical results).
        out_p = build(single_buffer_weights=False)(
            x_in, w_stack, b_stack, w_last, b_last)

    out = out_p
    if rows != M or o_pad != output_dim:
        out = out[:M, :output_dim]
    return out.reshape(*lead_shape, output_dim)


if __name__ == "__main__":
    key = jax.random.PRNGKey(0)
    key, xk, pk = jax.random.split(key, 3)

    # Small shapes consistent with the DETR-style MLP head.
    batch, seq = 2, 8
    input_dim, hidden_dim, output_dim, num_layers = 32, 32, 16, 3

    x = jax.random.normal(xk, (batch, seq, input_dim), jnp.float32)
    params = init_mlp_params(pk, input_dim, hidden_dim, output_dim, num_layers)
    packed, out_dim, num_hidden = pack_mlp_params(params)

    out = mlp_forward_fused(x, packed, out_dim, num_hidden)
    out = jax.block_until_ready(out)

    # Reference in plain JAX (torch semantics: x @ W.T + b, ReLU on all but the
    # last layer).  bf16 weights/MXU operands -> loosened tolerance.
    ref = x
    for i, (w, b) in enumerate(params):
        ref = ref @ w.T + b
        if i < num_layers - 1:
            ref = jnp.maximum(ref, 0.0)
    assert out.shape == (batch, seq, output_dim)
    err = float(jnp.max(jnp.abs(out - ref)))
    assert jnp.allclose(out, ref, atol=5e-2, rtol=5e-2), err

    # Also exercise the aligned fast path (no wrapper-side pad / slice copies).
    key, xk2, pk2 = jax.random.split(key, 3)
    x2 = jax.random.normal(xk2, (2, 64, 128), jnp.float32)
    params2 = init_mlp_params(pk2, 128, 128, 128, 2)
    packed2, out_dim2, nh2 = pack_mlp_params(params2)
    out2 = jax.block_until_ready(mlp_forward_fused(x2, packed2, out_dim2, nh2))
    ref2 = jnp.maximum(x2 @ params2[0][0].T + params2[0][1], 0.0)
    ref2 = ref2 @ params2[1][0].T + params2[1][1]
    err2 = float(jnp.max(jnp.abs(out2 - ref2)))
    assert out2.shape == (2, 64, 128)
    assert jnp.allclose(out2, ref2, atol=5e-2, rtol=5e-2), err2

    print("KERNEL_OK")
</pallas_src>

<mosaic_0001>
module attributes {stable_mosaic.version = 11 : i64} {
  func.func @_mlp_fused_kernel(%arg0: i32, %arg1: memref<8x128xf32, #tpu.memory_space<vmem>>, %arg2: memref<2x128x128xbf16, #tpu.memory_space<vmem>>, %arg3: memref<2x1x128xf32, #tpu.memory_space<vmem>>, %arg4: memref<128x128xbf16, #tpu.memory_space<vmem>>, %arg5: memref<1x128xf32, #tpu.memory_space<vmem>>, %arg6: memref<8x128xf32, #tpu.memory_space<vmem>>) attributes {dimension_semantics = [#tpu.dimension_semantics<parallel>], iteration_bounds = array<i64: 2>, scalar_prefetch = 0 : i64, scratch_operands = 0 : i64, tpu.core_type = #tpu.core_type<tc>, window_params = [{transform_indices = @transform_0, window_bounds = array<i64: 8, 128>}, {pipeline_mode = #tpu.pipeline_mode<synchronous>, transform_indices = @transform_1, window_bounds = array<i64: 2, 128, 128>}, {pipeline_mode = #tpu.pipeline_mode<synchronous>, transform_indices = @transform_2, window_bounds = array<i64: 2, 1, 128>}, {pipeline_mode = #tpu.pipeline_mode<synchronous>, transform_indices = @transform_3, window_bounds = array<i64: 128, 128>}, {pipeline_mode = #tpu.pipeline_mode<synchronous>, transform_indices = @transform_4, window_bounds = array<i64: 1, 128>}, {transform_indices = @transform_5, window_bounds = array<i64: 8, 128>}]} {
    %c0 = arith.constant 0 : index
    %c0_0 = arith.constant 0 : index
    %0 = vector.load %arg1[%c0, %c0_0] : memref<8x128xf32, #tpu.memory_space<vmem>>, vector<8x128xf32>
    %1 = arith.truncf %0 : vector<8x128xf32> to vector<8x128xbf16>
    %c0_1 = arith.constant 0 : index
    %c0_2 = arith.constant 0 : index
    %c0_3 = arith.constant 0 : index
    %2 = vector.load %arg2[%c0_1, %c0_2, %c0_3] : memref<2x128x128xbf16, #tpu.memory_space<vmem>>, vector<1x128x128xbf16>
    %3 = vector.shape_cast %2 : vector<1x128x128xbf16> to vector<128x128xbf16>
    %cst = arith.constant dense<0.000000e+00> : vector<8x128xf32>
    %4 = tpu.matmul %1, %3, %cst {dimension_numbers = #tpu.dot_dimension_numbers<[1], [0], [0], [1], [0, 0, 1, 1], [], []>} : vector<8x128xbf16>, vector<128x128xbf16>, vector<8x128xf32> -> vector<8x128xf32>
    %c0_4 = arith.constant 0 : index
    %c0_5 = arith.constant 0 : index
    %c0_6 = arith.constant 0 : index
    %5 = vector.load %arg3[%c0_4, %c0_5, %c0_6] : memref<2x1x128xf32, #tpu.memory_space<vmem>>, vector<1x1x128xf32>
    %6 = vector.shape_cast %5 : vector<1x1x128xf32> to vector<1x128xf32>
    %7 = vector.broadcast %6 : vector<1x128xf32> to vector<8x128xf32>
    %8 = arith.addf %4, %7 : vector<8x128xf32>
    %cst_7 = arith.constant 0.000000e+00 : f32
    %9 = vector.broadcast %cst_7 : f32 to vector<8x128xf32>
    %10 = arith.maximumf %8, %9 : vector<8x128xf32>
    %11 = arith.truncf %10 : vector<8x128xf32> to vector<8x128xbf16>
    %c1 = arith.constant 1 : index
    %c0_8 = arith.constant 0 : index
    %c0_9 = arith.constant 0 : index
    %12 = vector.load %arg2[%c1, %c0_8, %c0_9] : memref<2x128x128xbf16, #tpu.memory_space<vmem>>, vector<1x128x128xbf16>
    %13 = vector.shape_cast %12 : vector<1x128x128xbf16> to vector<128x128xbf16>
    %cst_10 = arith.constant dense<0.000000e+00> : vector<8x128xf32>
    %14 = tpu.matmul %11, %13, %cst_10 {dimension_numbers = #tpu.dot_dimension_numbers<[1], [0], [0], [1], [0, 0, 1, 1], [], []>} : vector<8x128xbf16>, vector<128x128xbf16>, vector<8x128xf32> -> vector<8x128xf32>
    %c1_11 = arith.constant 1 : index
    %c0_12 = arith.constant 0 : index
    %c0_13 = arith.constant 0 : index
    %15 = vector.load %arg3[%c1_11, %c0_12, %c0_13] : memref<2x1x128xf32, #tpu.memory_space<vmem>>, vector<1x1x128xf32>
    %16 = vector.shape_cast %15 : vector<1x1x128xf32> to vector<1x128xf32>
    %17 = vector.broadcast %16 : vector<1x128xf32> to vector<8x128xf32>
    %18 = arith.addf %14, %17 : vector<8x128xf32>
    %cst_14 = arith.constant 0.000000e+00 : f32
    %19 = vector.broadcast %cst_14 : f32 to vector<8x128xf32>
    %20 = arith.maximumf %18, %19 : vector<8x128xf32>
    %21 = arith.truncf %20 : vector<8x128xf32> to vector<8x128xbf16>
    %c0_15 = arith.constant 0 : index
    %c0_16 = arith.constant 0 : index
    %22 = vector.load %arg4[%c0_15, %c0_16] : memref<128x128xbf16, #tpu.memory_space<vmem>>, vector<128x128xbf16>
    %cst_17 = arith.constant dense<0.000000e+00> : vector<8x128xf32>
    %23 = tpu.matmul %21, %22, %cst_17 {dimension_numbers = #tpu.dot_dimension_numbers<[1], [0], [0], [1], [0, 0, 1, 1], [], []>} : vector<8x128xbf16>, vector<128x128xbf16>, vector<8x128xf32> -> vector<8x128xf32>
    %c0_18 = arith.constant 0 : index
    %c0_19 = arith.constant 0 : index
    %24 = vector.load %arg5[%c0_18, %c0_19] : memref<1x128xf32, #tpu.memory_space<vmem>>, vector<1x128xf32>
    %25 = vector.broadcast %24 : vector<1x128xf32> to vector<8x128xf32>
    %26 = arith.addf %23, %25 : vector<8x128xf32>
    %c0_20 = arith.constant 0 : index
    %c0_21 = arith.constant 0 : index
    %27 = vector.load %arg6[%c0_20, %c0_21] : memref<8x128xf32, #tpu.memory_space<vmem>>, vector<8x128xf32>
    tpu.vector_store %arg6[%c0_20, %c0_21], %26 {strides = array<i32>} : memref<8x128xf32, #tpu.memory_space<vmem>>, vector<8x128xf32>,
    return
  }
  func.func @transform_0(%arg0: i32) -> (i32, i32) {
    %c0_i32 = arith.constant 0 : i32
    %c0_i32_0 = arith.constant 0 : i32
    return %arg0, %c0_i32 : i32, i32
  }
  func.func @transform_1(%arg0: i32) -> (i32, i32, i32) {
    %c0_i32 = arith.constant 0 : i32
    %c0_i32_0 = arith.constant 0 : i32
    %c0_i32_1 = arith.constant 0 : i32
    %c0_i32_2 = arith.constant 0 : i32
    return %c0_i32, %c0_i32_0, %c0_i32_1 : i32, i32, i32
  }
  func.func @transform_2(%arg0: i32) -> (i32, i32, i32) {
    %c0_i32 = arith.constant 0 : i32
    %c0_i32_0 = arith.constant 0 : i32
    %c0_i32_1 = arith.constant 0 : i32
    %c0_i32_2 = arith.constant 0 : i32
    return %c0_i32, %c0_i32_0, %c0_i32_1 : i32, i32, i32
  }
  func.func @transform_3(%arg0: i32) -> (i32, i32) {
    %c0_i32 = arith.constant 0 : i32
    %c0_i32_0 = arith.constant 0 : i32
    %c0_i32_1 = arith.constant 0 : i32
    return %c0_i32, %c0_i32_0 : i32, i32
  }
  func.func @transform_4(%arg0: i32) -> (i32, i32) {
    %c0_i32 = arith.constant 0 : i32
    %c0_i32_0 = arith.constant 0 : i32
    %c0_i32_1 = arith.constant 0 : i32
    return %c0_i32, %c0_i32_0 : i32, i32
  }
  func.func @transform_5(%arg0: i32) -> (i32, i32) {
    %c0_i32 = arith.constant 0 : i32
    %c0_i32_0 = arith.constant 0 : i32
    return %arg0, %c0_i32 : i32, i32
  }
}

module attributes {stable_mosaic.version = 11 : i64} {
  func.func @_mlp_fused_kernel(%arg0: i32, %arg1: memref<8x128xf32, #tpu.memory_space<vmem>>, %arg2: memref<2x128x128xbf16, #tpu.memory_space<vmem>>, %arg3: memref<2x1x128xf32, #tpu.memory_space<vmem>>, %arg4: memref<128x128xbf16, #tpu.memory_space<vmem>>, %arg5: memref<1x128xf32, #tpu.memory_space<vmem>>, %arg6: memref<8x128xf32, #tpu.memory_space<vmem>>) attributes {dimension_semantics = [#tpu.dimension_semantics<parallel>], iteration_bounds = array<i64: 2>, scalar_prefetch = 0 : i64, scratch_operands = 0 : i64, tpu.core_type = #tpu.core_type<tc>, window_params = [{transform_indices = @transform_0, window_bounds = array<i64: 8, 128>}, {pipeline_mode = #tpu.pipeline_mode<synchronous>, transform_indices = @transform_1, window_bounds = array<i64: 2, 128, 128>}, {pipeline_mode = #tpu.pipeline_mode<synchronous>, transform_indices = @transform_2, window_bounds = array<i64: 2, 1, 128>}, {pipeline_mode = #tpu.pipeline_mode<synchronous>, transform_indices = @transform_3, window_bounds = array<i64: 128, 128>}, {pipeline_mode = #tpu.pipeline_mode<synchronous>, transform_indices = @transform_4, window_bounds = array<i64: 1, 128>}, {transform_indices = @transform_5, window_bounds = array<i64: 8, 128>}]} {
    %c0 = arith.constant 0 : index
    %c0_0 = arith.constant 0 : index
    %0 = vector.load %arg1[%c0, %c0_0] : memref<8x128xf32, #tpu.memory_space<vmem>>, vector<8x128xf32>
    %1 = arith.truncf %0 : vector<8x128xf32> to vector<8x128xbf16>
    %c0_1 = arith.constant 0 : index
    %c0_2 = arith.constant 0 : index
    %c0_3 = arith.constant 0 : index
    %2 = vector.load %arg2[%c0_1, %c0_2, %c0_3] : memref<2x128x128xbf16, #tpu.memory_space<vmem>>, vector<1x128x128xbf16>
    %3 = vector.shape_cast %2 : vector<1x128x128xbf16> to vector<128x128xbf16>
    %cst = arith.constant dense<0.000000e+00> : vector<8x128xf32>
    %4 = tpu.matmul %1, %3, %cst {dimension_numbers = #tpu.dot_dimension_numbers<[1], [0], [0], [1], [0, 0, 1, 1], [], []>} : vector<8x128xbf16>, vector<128x128xbf16>, vector<8x128xf32> -> vector<8x128xf32>
    %c0_4 = arith.constant 0 : index
    %c0_5 = arith.constant 0 : index
    %c0_6 = arith.constant 0 : index
    %5 = vector.load %arg3[%c0_4, %c0_5, %c0_6] : memref<2x1x128xf32, #tpu.memory_space<vmem>>, vector<1x1x128xf32>
    %6 = vector.shape_cast %5 : vector<1x1x128xf32> to vector<1x128xf32>
    %7 = vector.broadcast %6 : vector<1x128xf32> to vector<8x128xf32>
    %8 = arith.addf %4, %7 : vector<8x128xf32>
    %cst_7 = arith.constant 0.000000e+00 : f32
    %9 = vector.broadcast %cst_7 : f32 to vector<8x128xf32>
    %10 = arith.maximumf %8, %9 : vector<8x128xf32>
    %11 = arith.truncf %10 : vector<8x128xf32> to vector<8x128xbf16>
    %c1 = arith.constant 1 : index
    %c0_8 = arith.constant 0 : index
    %c0_9 = arith.constant 0 : index
    %12 = vector.load %arg2[%c1, %c0_8, %c0_9] : memref<2x128x128xbf16, #tpu.memory_space<vmem>>, vector<1x128x128xbf16>
    %13 = vector.shape_cast %12 : vector<1x128x128xbf16> to vector<128x128xbf16>
    %cst_10 = arith.constant dense<0.000000e+00> : vector<8x128xf32>
    %14 = tpu.matmul %11, %13, %cst_10 {dimension_numbers = #tpu.dot_dimension_numbers<[1], [0], [0], [1], [0, 0, 1, 1], [], []>} : vector<8x128xbf16>, vector<128x128xbf16>, vector<8x128xf32> -> vector<8x128xf32>
    %c1_11 = arith.constant 1 : index
    %c0_12 = arith.constant 0 : index
    %c0_13 = arith.constant 0 : index
    %15 = vector.load %arg3[%c1_11, %c0_12, %c0_13] : memref<2x1x128xf32, #tpu.memory_space<vmem>>, vector<1x1x128xf32>
    %16 = vector.shape_cast %15 : vector<1x1x128xf32> to vector<1x128xf32>
    %17 = vector.broadcast %16 : vector<1x128xf32> to vector<8x128xf32>
    %18 = arith.addf %14, %17 : vector<8x128xf32>
    %cst_14 = arith.constant 0.000000e+00 : f32
    %19 = vector.broadcast %cst_14 : f32 to vector<8x128xf32>
    %20 = arith.maximumf %18, %19 : vector<8x128xf32>
    %21 = arith.truncf %20 : vector<8x128xf32> to vector<8x128xbf16>
    %c0_15 = arith.constant 0 : index
    %c0_16 = arith.constant 0 : index
    %22 = vector.load %arg4[%c0_15, %c0_16] : memref<128x128xbf16, #tpu.memory_space<vmem>>, vector<128x128xbf16>
    %cst_17 = arith.constant dense<0.000000e+00> : vector<8x128xf32>
    %23 = tpu.matmul %21, %22, %cst_17 {dimension_numbers = #tpu.dot_dimension_numbers<[1], [0], [0], [1], [0, 0, 1, 1], [], []>} : vector<8x128xbf16>, vector<128x128xbf16>, vector<8x128xf32> -> vector<8x128xf32>
    %c0_18 = arith.constant 0 : index
    %c0_19 = arith.constant 0 : index
    %24 = vector.load %arg5[%c0_18, %c0_19] : memref<1x128xf32, #tpu.memory_space<vmem>>, vector<1x128xf32>
    %25 = vector.broadcast %24 : vector<1x128xf32> to vector<8x128xf32>
    %26 = arith.addf %23, %25 : vector<8x128xf32>
    %c0_20 = arith.constant 0 : index
    %c0_21 = arith.constant 0 : index
    %27 = vector.load %arg6[%c0_20, %c0_21] : memref<8x128xf32, #tpu.memory_space<vmem>>, vector<8x128xf32>
    tpu.vector_store %arg6[%c0_20, %c0_21], %26 {strides = array<i32>} : memref<8x128xf32, #tpu.memory_space<vmem>>, vector<8x128xf32>,
    return
  }
  func.func @transform_0(%arg0: i32) -> (i32, i32) {
    %c0_i32 = arith.constant 0 : i32
    %c0_i32_0 = arith.constant 0 : i32
    return %arg0, %c0_i32 : i32, i32
  }
  func.func @transform_1(%arg0: i32) -> (i32, i32, i32) {
    %c0_i32 = arith.constant 0 : i32
    %c0_i32_0 = arith.constant 0 : i32
    %c0_i32_1 = arith.constant 0 : i32
    %c0_i32_2 = arith.constant 0 : i32
    return %c0_i32, %c0_i32_0, %c0_i32_1 : i32, i32, i32
  }
  func.func @transform_2(%arg0: i32) -> (i32, i32, i32) {
    %c0_i32 = arith.constant 0 : i32
    %c0_i32_0 = arith.constant 0 : i32
    %c0_i32_1 = arith.constant 0 : i32
    %c0_i32_2 = arith.constant 0 : i32
    return %c0_i32, %c0_i32_0, %c0_i32_1 : i32, i32, i32
  }
  func.func @transform_3(%arg0: i32) -> (i32, i32) {
    %c0_i32 = arith.constant 0 : i32
    %c0_i32_0 = arith.constant 0 : i32
    %c0_i32_1 = arith.constant 0 : i32
    return %c0_i32, %c0_i32_0 : i32, i32
  }
  func.func @transform_4(%arg0: i32) -> (i32, i32) {
    %c0_i32 = arith.constant 0 : i32
    %c0_i32_0 = arith.constant 0 : i32
    %c0_i32_1 = arith.constant 0 : i32
    return %c0_i32, %c0_i32_0 : i32, i32
  }
  func.func @transform_5(%arg0: i32) -> (i32, i32) {
    %c0_i32 = arith.constant 0 : i32
    %c0_i32_0 = arith.constant 0 : i32
    return %arg0, %c0_i32 : i32, i32
  }
}

</mosaic_0001>

<llo_original>
// kernel: tpu_custom_call.1
$region0: #{tpu_custom_call.1}
  #allocation0 [shape = 'u32[]', space=smem, size = 0x4, offset = 0x4, fixed_abs, tag = 'smem constant byte address 0x4 - core index']
  #allocation1 [shape = 'u32[144,128]{1,0:T(1,128)}', space=vmem, size = 0x12000, scoped, tag = 'internal scratch']
  %s0 = inlined_call_operand.hbm [shape: f32[16,128], index: 0, kind: input, shape index: {}]
  %s1 = inlined_call_operand.hbm [shape: bf16[2,128,128], index: 1, kind: input, shape index: {}]
  %s2 = inlined_call_operand.vmem [shape: f32[2,1,128], index: 2, kind: input, shape index: {}]
  %s3 = inlined_call_operand.hbm [shape: bf16[128,128], index: 3, kind: input, shape index: {}]
  %s4 = inlined_call_operand.vmem [shape: f32[1,128], index: 4, kind: input, shape index: {}]
  %s5 = inlined_call_operand.hbm [shape: f32[16,128], index: 5, kind: output, shape index: {}]
  %s6 = sld [smem:[#allocation0]]
  $region65: #{tpu_custom_call.1} parent=0
    _
  %s8 = ssub.s32 1, %s6
  %s9 = scalar_select 0, %s8, %s6
  $region1: #{tpu_custom_call.1} parent=0
    #allocation2 [shape = 'u8[8192]{0}', space=vmem, size = 0x2000, scoped, tag = 'input window, operand 0']
    #allocation3 [shape = 's32[2]{0}', space=sflag, size = 0x8, scoped, tag = 'scoped memory for tpu_custom_call.1']
    #allocation4 [shape = 's32[2]{0}', space=sflag, size = 0x8, scoped, tag = 'scoped memory for tpu_custom_call.1']
    #allocation5 [shape = 'u8[65536]{0}', space=vmem, size = 0x10000, scoped, tag = 'input window, operand 1, single buffered']
    #allocation6 [shape = 's32[1]{0}', space=sflag, size = 0x4, scoped, tag = 'scoped memory for tpu_custom_call.1']
    #allocation7 [shape = 'u8[32768]{0}', space=vmem, size = 0x8000, scoped, tag = 'input window, operand 3, single buffered']
    #allocation8 [shape = 'u8[8192]{0}', space=vmem, size = 0x2000, scoped, tag = 'output window, operand 0']
    %10 = vsyncpa [#allocation3], 0
    %s11 = scalar_lea.sflag [#allocation3], 1
    %12 = vsyncpa %s11, 0
    %13 = vsyncpa [#allocation6], 0
    %14 = vsyncpa [#allocation4], 0
    %s15 = scalar_lea.sflag [#allocation4], 1
    %16 = vsyncpa %s15, 0
    loop: start=0, step=1, limit=4
    $region2: #{tpu_custom_call.1} parent=1 // loop_pre_header
      _
    $region3: #{tpu_custom_call.1} parent=1 // loop_header
      %s18 = sphi 0, %s22
      %p19 = scmp.ge.s32.totalorder %s18, 4
      %s28 = sphi 0, %s30
      %s31 = sphi 0, %s28
      %s32 = sphi 0, %s31
      %s48 = sphi 0, %s32
      %s52 = sphi 0, %s52
      %s54 = sphi 0, %s52
      %s55 = sphi 0, %s54
      %s69 = sphi 0, %s55
      %s73 = sphi 0, %s73
      %s75 = sphi 0, %s73
      %s76 = sphi 0, %s75
      %s90 = sphi 0, %s76
      %s94 = sphi 0, %s94
      %s96 = sphi 0, %s94
      %s97 = sphi 0, %s96
      %s111 = sphi 0, %s97
      %s115 = sphi 0, %s115
      %s117 = sphi 0, %s115
      %s118 = sphi 0, %s117
      %s132 = sphi 0, %s118
      %s138 = sphi 0, %s140
      %s141 = sphi 0, %s138
      %s142 = sphi 0, %s141
      %s158 = sphi 0, %s142
    $region4: #{tpu_custom_call.1} parent=1 // loop_header_branch
      %21 = sbr.rel (%p19) target = $region8
    $region5: #{tpu_custom_call.1} parent=1 // loop_body
      %s23 = ssub.s32 %s18, 1
      %s24 = ssub.s32 %s18, 2
      %s25 = sadd.s32 %s18, 1
      %s26 = ssub.s32 %s18, %s25
      %p27 = scmp.eq.s32.totalorder %s26, 0
      %s29 = sadd.s32 %s28, 1
      %s30 = scalar_select %p27, %s28, %s29
      %p33 = pneg %p27
      %p34 = scmp.eq.s32.totalorder %s18, 1
      %p35 = por %p33, %p34
      %p36 = scmp.ne.s32.totalorder %s28, %s31
      %p37 = scmp.eq.s32.totalorder %s18, 0
      %p38 = por %p36, %p37
      %p39 = scmp.ne.s32.totalorder %s28, %s31
      %p40 = scmp.eq.s32.totalorder %s23, 1
      %p41 = por %p39, %p40
      %p42 = scmp.ne.s32.totalorder %s31, %s32
      %p43 = scmp.eq.s32.totalorder %s23, 0
      %p44 = por %p42, %p43
      %p45 = scmp.ne.s32.totalorder %s31, %s32
      %p46 = scmp.eq.s32.totalorder %s24, 1
      %p47 = por %p45, %p46
      %p49 = scmp.ne.s32.totalorder %s32, %s48
      %p50 = scmp.eq.s32.totalorder %s24, 0
      %p51 = por %p49, %p50
      %s53 = sadd.s32 %s52, 1
      %p56 = scmp.eq.s32.totalorder %s18, 1
      %p57 = scmp.ne.s32.totalorder %s52, %s54
      %p58 = scmp.eq.s32.totalorder %s18, 0
      %p59 = por %p57, %p58
      %p60 = scmp.ne.s32.totalorder %s52, %s54
      %p61 = scmp.eq.s32.totalorder %s23, 1
      %p62 = por %p60, %p61
      %p63 = scmp.ne.s32.totalorder %s54, %s55
      %p64 = scmp.eq.s32.totalorder %s23, 0
      %p65 = por %p63, %p64
      %p66 = scmp.ne.s32.totalorder %s54, %s55
      %p67 = scmp.eq.s32.totalorder %s24, 1
      %p68 = por %p66, %p67
      %p70 = scmp.ne.s32.totalorder %s55, %s69
      %p71 = scmp.eq.s32.totalorder %s24, 0
      %p72 = por %p70, %p71
      %s74 = sadd.s32 %s73, 1
      %p77 = scmp.eq.s32.totalorder %s18, 1
      %p78 = scmp.ne.s32.totalorder %s73, %s75
      %p79 = scmp.eq.s32.totalorder %s18, 0
      %p80 = por %p78, %p79
      %p81 = scmp.ne.s32.totalorder %s73, %s75
      %p82 = scmp.eq.s32.totalorder %s23, 1
      %p83 = por %p81, %p82
      %p84 = scmp.ne.s32.totalorder %s75, %s76
      %p85 = scmp.eq.s32.totalorder %s23, 0
      %p86 = por %p84, %p85
      %p87 = scmp.ne.s32.totalorder %s75, %s76
      %p88 = scmp.eq.s32.totalorder %s24, 1
      %p89 = por %p87, %p88
      %p91 = scmp.ne.s32.totalorder %s76, %s90
      %p92 = scmp.eq.s32.totalorder %s24, 0
      %p93 = por %p91, %p92
      %s95 = sadd.s32 %s94, 1
      %p98 = scmp.eq.s32.totalorder %s18, 1
      %p99 = scmp.ne.s32.totalorder %s94, %s96
      %p100 = scmp.eq.s32.totalorder %s18, 0
      %p101 = por %p99, %p100
      %p102 = scmp.ne.s32.totalorder %s94, %s96
      %p103 = scmp.eq.s32.totalorder %s23, 1
      %p104 = por %p102, %p103
      %p105 = scmp.ne.s32.totalorder %s96, %s97
      %p106 = scmp.eq.s32.totalorder %s23, 0
      %p107 = por %p105, %p106
      %p108 = scmp.ne.s32.totalorder %s96, %s97
      %p109 = scmp.eq.s32.totalorder %s24, 1
      %p110 = por %p108, %p109
      %p112 = scmp.ne.s32.totalorder %s97, %s111
      %p113 = scmp.eq.s32.totalorder %s24, 0
      %p114 = por %p112, %p113
      %s116 = sadd.s32 %s115, 1
      %p119 = scmp.eq.s32.totalorder %s18, 1
      %p120 = scmp.ne.s32.totalorder %s115, %s117
      %p121 = scmp.eq.s32.totalorder %s18, 0
      %p122 = por %p120, %p121
      %p123 = scmp.ne.s32.totalorder %s115, %s117
      %p124 = scmp.eq.s32.totalorder %s23, 1
      %p125 = por %p123, %p124
      %p126 = scmp.ne.s32.totalorder %s117, %s118
      %p127 = scmp.eq.s32.totalorder %s23, 0
      %p128 = por %p126, %p127
      %p129 = scmp.ne.s32.totalorder %s117, %s118
      %p130 = scmp.eq.s32.totalorder %s24, 1
      %p131 = por %p129, %p130
      %p133 = scmp.ne.s32.totalorder %s118, %s132
      %p134 = scmp.eq.s32.totalorder %s24, 0
      %p135 = por %p133, %p134
      %s136 = ssub.s32 %s18, %s25
      %p137 = scmp.eq.s32.totalorder %s136, 0
      %s139 = sadd.s32 %s138, 1
      %s140 = scalar_select %p137, %s138, %s139
      %p143 = pneg %p137
      %p144 = scmp.eq.s32.totalorder %s18, 1
      %p145 = por %p143, %p144
      %p146 = scmp.ne.s32.totalorder %s138, %s141
      %p147 = scmp.eq.s32.totalorder %s18, 0
      %p148 = por %p146, %p147
      %p149 = scmp.ne.s32.totalorder %s138, %s141
      %p150 = scmp.eq.s32.totalorder %s23, 1
      %p151 = por %p149, %p150
      %p152 = scmp.ne.s32.totalorder %s141, %s142
      %p153 = scmp.eq.s32.totalorder %s23, 0
      %p154 = por %p152, %p153
      %p155 = scmp.ne.s32.totalorder %s141, %s142
      %p156 = scmp.eq.s32.totalorder %s24, 1
      %p157 = por %p155, %p156
      %p159 = scmp.ne.s32.totalorder %s142, %s158
      %p160 = scmp.eq.s32.totalorder %s24, 0
      %p161 = por %p159, %p160
      %p162 = scmp.le.s32.totalorder 1, %s18
      %p163 = scmp.lt.s32.totalorder %s18, 3
      %p164 = pnand %p162, %p163
      %p165 = pneg %p164
      // Predicated region
      $region9: #{tpu_custom_call.1} parent=5 // pred_check
        _
      $region10: #{tpu_custom_call.1} parent=5 // pred_check_branch
        %167 = sbr.rel (%p164) target = $region12
      $region11: #{tpu_custom_call.1} parent=5 // pred_region
        %s168 = ssub.s32 %s18, 1
        // Predicated region
        $region13: #{tpu_custom_call.1} parent=11 // pred_check
          %p169 = pneg %p65
        $region14: #{tpu_custom_call.1} parent=11 // pred_check_branch
          %171 = sbr.rel (%p169) target = $region16
        $region15: #{tpu_custom_call.1} parent=11 // pred_region
          %s173 = ssub.s32 2048, 2048
          %174 = vsyncadd [#allocation6], %s173
          %s175 = sshll.u32 [#allocation5], 4
          %s176 = int_to_ptr.vmem [resolvable:$true] %s175
          %181 = dma.hbm_to_vmem [thread:$0]  %s1, 2048, %s176, [#allocation6], 64, 64, 4
        $region16: #{tpu_custom_call.1} parent=11 // pred_fallthru
          _
        // Predicated region
        $region17: #{tpu_custom_call.1} parent=11 // pred_check
          %p182 = pneg %p86
        $region18: #{tpu_custom_call.1} parent=11 // pred_check_branch
          %184 = sbr.rel (%p182) target = $region20
        $region19: #{tpu_custom_call.1} parent=11 // pred_region
          _
        $region20: #{tpu_custom_call.1} parent=11 // pred_fallthru
          _
        // Predicated region
        $region21: #{tpu_custom_call.1} parent=11 // pred_check
          %p185 = pneg %p107
        $region22: #{tpu_custom_call.1} parent=11 // pred_check_branch
          %187 = sbr.rel (%p185) target = $region24
        $region23: #{tpu_custom_call.1} parent=11 // pred_region
          %s189 = ssub.s32 1024, 1024
          %190 = vsyncadd [#allocation6], %s189
          %s191 = sshll.u32 [#allocation7], 4
          %s192 = int_to_ptr.vmem [resolvable:$true] %s191
          %197 = dma.hbm_to_vmem [thread:$0]  %s3, 1024, %s192, [#allocation6], 64, 64, 4
        $region24: #{tpu_custom_call.1} parent=11 // pred_fallthru
          _
        // Predicated region
        $region25: #{tpu_custom_call.1} parent=11 // pred_check
          %p198 = pneg %p128
        $region26: #{tpu_custom_call.1} parent=11 // pred_check_branch
          %200 = sbr.rel (%p198) target = $region28
        $region27: #{tpu_custom_call.1} parent=11 // pred_region
          _
        $region28: #{tpu_custom_call.1} parent=11 // pred_fallthru
          _
      $region12: #{tpu_custom_call.1} parent=5 // pred_fallthru
        _
      %p201 = scmp.lt.s32.totalorder %s18, 2
      // Predicated region
      $region29: #{tpu_custom_call.1} parent=5 // pred_check
        %p202 = pneg %p201
      $region30: #{tpu_custom_call.1} parent=5 // pred_check_branch
        %204 = sbr.rel (%p202) target = $region32
      $region31: #{tpu_custom_call.1} parent=5 // pred_region
        // Predicated region
        $region33: #{tpu_custom_call.1} parent=31 // pred_check
          %p205 = pneg %p38
        $region34: #{tpu_custom_call.1} parent=31 // pred_check_branch
          %207 = sbr.rel (%p205) target = $region36
        $region35: #{tpu_custom_call.1} parent=31 // pred_region
          %s208 = sand.u32 %s28, 1
          %s209 = scalar_lea.sflag [#allocation3], %s208
          %s210 = sand.u32 %s28, 1
          %s211 = smul.addr %s210, 8
          %s212 = scalar_lea.vmem [#allocation2], %s211
          %s214 = ssub.s32 128, 128
          %215 = vsyncadd %s209, %s214
          %s216 = smul.addr %s18, 128
          %s217 = scalar_lea.hbm %s0, %s216
          %s219 = sshll.u32 %s212, 4
          %s220 = int_to_ptr.vmem [resolvable:$true] %s219
          %222 = dma.hbm_to_vmem [thread:$0]  %s217, 128, %s220, %s209
        $region36: #{tpu_custom_call.1} parent=31 // pred_fallthru
          _
      $region32: #{tpu_custom_call.1} parent=5 // pred_fallthru
        _
      %p223 = scmp.le.s32.totalorder 1, %s18
      %p224 = scmp.lt.s32.totalorder %s18, 3
      %p225 = pnand %p223, %p224
      %p226 = pneg %p225
      // Predicated region
      $region37: #{tpu_custom_call.1} parent=5 // pred_check
        _
      $region38: #{tpu_custom_call.1} parent=5 // pred_check_branch
        %228 = sbr.rel (%p225) target = $region40
      $region39: #{tpu_custom_call.1} parent=5 // pred_region
        %s229 = ssub.s32 %s18, 1
        %s230 = sand.u32 %s31, 1
        %s231 = scalar_lea.sflag [#allocation3], %s230
        %s232 = sand.u32 %s31, 1
        %s233 = smul.addr %s232, 8
        %s234 = scalar_lea.vmem [#allocation2], %s233
        // Predicated region
        $region41: #{tpu_custom_call.1} parent=39 // pred_check
          %p235 = pneg %p44
        $region42: #{tpu_custom_call.1} parent=39 // pred_check_branch
          %237 = sbr.rel (%p235) target = $region44
        $region43: #{tpu_custom_call.1} parent=39 // pred_region
          %238 = dma.done %s231, 128
        $region44: #{tpu_custom_call.1} parent=39 // pred_fallthru
          _
        // Predicated region
        $region45: #{tpu_custom_call.1} parent=39 // pred_check
          %p239 = pneg %p65
        $region46: #{tpu_custom_call.1} parent=39 // pred_check_branch
          %241 = sbr.rel (%p239) target = $region48
        $region47: #{tpu_custom_call.1} parent=39 // pred_region
          %242 = dma.done [#allocation6], 2048
        $region48: #{tpu_custom_call.1} parent=39 // pred_fallthru
          _
        // Predicated region
        $region49: #{tpu_custom_call.1} parent=39 // pred_check
          %p243 = pneg %p107
        $region50: #{tpu_custom_call.1} parent=39 // pred_check_branch
          %245 = sbr.rel (%p243) target = $region52
        $region51: #{tpu_custom_call.1} parent=39 // pred_region
          %246 = dma.done [#allocation6], 1024
        $region52: #{tpu_custom_call.1} parent=39 // pred_fallthru
          _
        %s247 = sand.u32 %s31, 1
        %s248 = scalar_lea.sflag [#allocation3], %s247
        %s249 = sand.u32 %s31, 1
        %s250 = smul.addr %s249, 8
        %s251 = scalar_lea.vmem [#allocation2], %s250
        %p252 = pneg %p44
        %p253 = pneg %p41
        %p254 = pneg %p65
        %p255 = pneg %p62
        %p256 = pneg %p86
        %p257 = pneg %p83
        %p258 = pneg %p107
        %p259 = pneg %p104
        %p260 = pneg %p128
        %p261 = pneg %p125
        %p262 = pneg %p154
        %p263 = pneg %p151
        %s264 = sand.u32 %s141, 1
        %s265 = scalar_lea.sflag [#allocation4], %s264
        %s266 = sand.u32 %s141, 1
        %s267 = smul.addr %s266, 8
        %s268 = scalar_lea.vmem [#allocation8], %s267
        %v270 = vld [vmem:[%s234] sm:$0xff]
        %v271 = vpack.c.bf16 %v270, %v270
        %v272 = vld [vmem:[#allocation5] sm:$0xf]
        %v273 = vld [vmem:[#allocation5 + $0x4] sm:$0xf]
        %v274 = vld [vmem:[#allocation5 + $0x8] sm:$0xf]
        %v275 = vld [vmem:[#allocation5 + $0xc] sm:$0xf]
        %v276 = vld [vmem:[#allocation5 + $0x10] sm:$0xf]
        %v277 = vld [vmem:[#allocation5 + $0x14] sm:$0xf]
        %v278 = vld [vmem:[#allocation5 + $0x18] sm:$0xf]
        %v279 = vld [vmem:[#allocation5 + $0x1c] sm:$0xf]
        %v280 = vld [vmem:[#allocation5 + $0x20] sm:$0xf]
        %v281 = vld [vmem:[#allocation5 + $0x24] sm:$0xf]
        %v282 = vld [vmem:[#allocation5 + $0x28] sm:$0xf]
        %v283 = vld [vmem:[#allocation5 + $0x2c] sm:$0xf]
        %v284 = vld [vmem:[#allocation5 + $0x30] sm:$0xf]
        %v285 = vld [vmem:[#allocation5 + $0x34] sm:$0xf]
        %v286 = vld [vmem:[#allocation5 + $0x38] sm:$0xf]
        %v287 = vld [vmem:[#allocation5 + $0x3c] sm:$0xf]
        %v288 = vld [vmem:[%s2] sm:$0x1]
        %v290 = vlaneseq
        %v291 = vshrl.u32 %v290, 7
        %v292 = vsub.s32 0, %v291
        %v293 = vrot.slane %v288, %v292
        %v311 = vunpack.c.l.b16 %v272
        %v312 = vunpack.c.l.b16 %v273
        %v313 = vunpack.c.l.b16 %v274
        %v314 = vunpack.c.l.b16 %v275
        %v315 = vunpack.c.l.b16 %v276
        %v316 = vunpack.c.l.b16 %v277
        %v317 = vunpack.c.l.b16 %v278
        %v318 = vunpack.c.l.b16 %v279
        %v319 = vunpack.c.l.b16 %v280
        %v320 = vunpack.c.l.b16 %v281
        %v321 = vunpack.c.l.b16 %v282
        %v322 = vunpack.c.l.b16 %v283
        %v323 = vunpack.c.l.b16 %v284
        %v324 = vunpack.c.l.b16 %v285
        %v325 = vunpack.c.l.b16 %v286
        %v326 = vunpack.c.l.b16 %v287
        %v327 = vpack.c.b16 %v312, %v311
        %v328 = vpack.c.b16 %v314, %v313
        %v329 = vpack.c.b16 %v316, %v315
        %v330 = vpack.c.b16 %v318, %v317
        %v331 = vpack.c.b16 %v320, %v319
        %v332 = vpack.c.b16 %v322, %v321
        %v333 = vpack.c.b16 %v324, %v323
        %v334 = vpack.c.b16 %v326, %v325
        %343 = vmatprep.subr.bf16.mxu0 0
        %344 = vmatpush1.bf16.msra.mxu0 %v327
        %345 = vmatprep.subr.bf16.mxu0 0
        %346 = vmatpush1.bf16.msra.mxu0 %v328
        %347 = vmatprep.subr.bf16.mxu0 0
        %348 = vmatpush1.bf16.msra.mxu0 %v329
        %349 = vmatprep.subr.bf16.mxu0 0
        %350 = vmatpush1.bf16.msra.mxu0 %v330
        %351 = vmatprep.subr.bf16.mxu0 0
        %352 = vmatpush1.bf16.msra.mxu0 %v331
        %353 = vmatprep.subr.bf16.mxu0 0
        %354 = vmatpush1.bf16.msra.mxu0 %v332
        %355 = vmatprep.subr.bf16.mxu0 0
        %356 = vmatpush1.bf16.msra.mxu0 %v333
        %357 = vmatprep.subr.bf16.mxu0 0
        %358 = vmatpush1.bf16.msra.mxu0 %v334
        %359 = vmatprep.subr.bf16.mxu0 0
        %360 = vmatpush1.bf16.msra.mxu0 0
        %361 = vmatprep.subr.bf16.mxu0 0
        %362 = vmatpush1.bf16.msra.mxu0 0
        %363 = vmatprep.subr.bf16.mxu0 0
        %364 = vmatpush1.bf16.msra.mxu0 0
        %365 = vmatprep.subr.bf16.mxu0 0
        %366 = vmatpush1.bf16.msra.mxu0 0
        %367 = vmatprep.subr.bf16.mxu0 0
        %368 = vmatpush1.bf16.msra.mxu0 0
        %369 = vmatprep.subr.bf16.mxu0 0
        %370 = vmatpush1.bf16.msra.mxu0 0
        %371 = vmatprep.subr.bf16.mxu0 0
        %372 = vmatpush1.bf16.msra.mxu0 0
        %373 = vmatprep.subr.bf16.mxu0 0
        %374 = vmatpush1.bf16.msra.mxu0 0
        %375 = vmatprep.mubr.bf16.mxu0 0
        %376 = vmatmul.mubr.bf16.gmra.mrb[0].mxu0 %v271
        %v377 = vpop.f32.mrb[0].mxu0
        %v378 = vadd.f32 %v293, %v377
        %v379 = vpop.f32.mrb[0].mxu0
        %v380 = vpop.f32.mrb[0].mxu0
        %v381 = vpop.f32.mrb[0].mxu0
        %382 = vdwg.mxu0
        %v383 = vmax.f32 %v378, 0.0
        %v384 = vpack.c.bf16 %v383, %v383
        %s385 = scalar_lea.vmem [#allocation5], 64
        %v386 = vld [vmem:[%s385] sm:$0xf]
        %v387 = vld [vmem:[%s385 + $0x4] sm:$0xf]
        %v388 = vld [vmem:[%s385 + $0x8] sm:$0xf]
        %v389 = vld [vmem:[%s385 + $0xc] sm:$0xf]
        %v390 = vld [vmem:[%s385 + $0x10] sm:$0xf]
        %v391 = vld [vmem:[%s385 + $0x14] sm:$0xf]
        %v392 = vld [vmem:[%s385 + $0x18] sm:$0xf]
        %v393 = vld [vmem:[%s385 + $0x1c] sm:$0xf]
        %v394 = vld [vmem:[%s385 + $0x20] sm:$0xf]
        %v395 = vld [vmem:[%s385 + $0x24] sm:$0xf]
        %v396 = vld [vmem:[%s385 + $0x28] sm:$0xf]
        %v397 = vld [vmem:[%s385 + $0x2c] sm:$0xf]
        %v398 = vld [vmem:[%s385 + $0x30] sm:$0xf]
        %v399 = vld [vmem:[%s385 + $0x34] sm:$0xf]
        %v400 = vld [vmem:[%s385 + $0x38] sm:$0xf]
        %v401 = vld [vmem:[%s385 + $0x3c] sm:$0xf]
        %s402 = scalar_lea.vmem %s2, 1
        %v403 = vld [vmem:[%s402] sm:$0x1]
        %v405 = vlaneseq
        %v406 = vshrl.u32 %v405, 7
        %v407 = vsub.s32 0, %v406
        %v408 = vrot.slane %v403, %v407
        %v426 = vunpack.c.l.b16 %v386
        %v427 = vunpack.c.l.b16 %v387
        %v428 = vunpack.c.l.b16 %v388
        %v429 = vunpack.c.l.b16 %v389
        %v430 = vunpack.c.l.b16 %v390
        %v431 = vunpack.c.l.b16 %v391
        %v432 = vunpack.c.l.b16 %v392
        %v433 = vunpack.c.l.b16 %v393
        %v434 = vunpack.c.l.b16 %v394
        %v435 = vunpack.c.l.b16 %v395
        %v436 = vunpack.c.l.b16 %v396
        %v437 = vunpack.c.l.b16 %v397
        %v438 = vunpack.c.l.b16 %v398
        %v439 = vunpack.c.l.b16 %v399
        %v440 = vunpack.c.l.b16 %v400
        %v441 = vunpack.c.l.b16 %v401
        %v442 = vpack.c.b16 %v427, %v426
        %v443 = vpack.c.b16 %v429, %v428
        %v444 = vpack.c.b16 %v431, %v430
        %v445 = vpack.c.b16 %v433, %v432
        %v446 = vpack.c.b16 %v435, %v434
        %v447 = vpack.c.b16 %v437, %v436
        %v448 = vpack.c.b16 %v439, %v438
        %v449 = vpack.c.b16 %v441, %v440
        %458 = vmatprep.subr.bf16.mxu0 0
        %459 = vmatpush1.bf16.msra.mxu0 %v442
        %460 = vmatprep.subr.bf16.mxu0 0
        %461 = vmatpush1.bf16.msra.mxu0 %v443
        %462 = vmatprep.subr.bf16.mxu0 0
        %463 = vmatpush1.bf16.msra.mxu0 %v444
        %464 = vmatprep.subr.bf16.mxu0 0
        %465 = vmatpush1.bf16.msra.mxu0 %v445
        %466 = vmatprep.subr.bf16.mxu0 0
        %467 = vmatpush1.bf16.msra.mxu0 %v446
        %468 = vmatprep.subr.bf16.mxu0 0
        %469 = vmatpush1.bf16.msra.mxu0 %v447
        %470 = vmatprep.subr.bf16.mxu0 0
        %471 = vmatpush1.bf16.msra.mxu0 %v448
        %472 = vmatprep.subr.bf16.mxu0 0
        %473 = vmatpush1.bf16.msra.mxu0 %v449
        %474 = vmatprep.subr.bf16.mxu0 0
        %475 = vmatpush1.bf16.msra.mxu0 0
        %476 = vmatprep.subr.bf16.mxu0 0
        %477 = vmatpush1.bf16.msra.mxu0 0
        %478 = vmatprep.subr.bf16.mxu0 0
        %479 = vmatpush1.bf16.msra.mxu0 0
        %480 = vmatprep.subr.bf16.mxu0 0
        %481 = vmatpush1.bf16.msra.mxu0 0
        %482 = vmatprep.subr.bf16.mxu0 0
        %483 = vmatpush1.bf16.msra.mxu0 0
        %484 = vmatprep.subr.bf16.mxu0 0
        %485 = vmatpush1.bf16.msra.mxu0 0
        %486 = vmatprep.subr.bf16.mxu0 0
        %487 = vmatpush1.bf16.msra.mxu0 0
        %488 = vmatprep.subr.bf16.mxu0 0
        %489 = vmatpush1.bf16.msra.mxu0 0
        %490 = vmatprep.mubr.bf16.mxu0 0
        %491 = vmatmul.mubr.bf16.gmra.mrb[0].mxu0 %v384
        %v492 = vpop.f32.mrb[0].mxu0
        %v493 = vadd.f32 %v408, %v492
        %v494 = vpop.f32.mrb[0].mxu0
        %v495 = vpop.f32.mrb[0].mxu0
        %v496 = vpop.f32.mrb[0].mxu0
        %497 = vdwg.mxu0
        %v498 = vmax.f32 %v493, 0.0
        %v499 = vpack.c.bf16 %v498, %v498
        %v500 = vld [vmem:[#allocation7] sm:$0xf]
        %v501 = vld [vmem:[#allocation7 + $0x4] sm:$0xf]
        %v502 = vld [vmem:[#allocation7 + $0x8] sm:$0xf]
        %v503 = vld [vmem:[#allocation7 + $0xc] sm:$0xf]
        %v504 = vld [vmem:[#allocation7 + $0x10] sm:$0xf]
        %v505 = vld [vmem:[#allocation7 + $0x14] sm:$0xf]
        %v506 = vld [vmem:[#allocation7 + $0x18] sm:$0xf]
        %v507 = vld [vmem:[#allocation7 + $0x1c] sm:$0xf]
        %v508 = vld [vmem:[#allocation7 + $0x20] sm:$0xf]
        %v509 = vld [vmem:[#allocation7 + $0x24] sm:$0xf]
        %v510 = vld [vmem:[#allocation7 + $0x28] sm:$0xf]
        %v511 = vld [vmem:[#allocation7 + $0x2c] sm:$0xf]
        %v512 = vld [vmem:[#allocation7 + $0x30] sm:$0xf]
        %v513 = vld [vmem:[#allocation7 + $0x34] sm:$0xf]
        %v514 = vld [vmem:[#allocation7 + $0x38] sm:$0xf]
        %v515 = vld [vmem:[#allocation7 + $0x3c] sm:$0xf]
        %v516 = vld [vmem:[%s4] sm:$0x1]
        %v518 = vlaneseq
        %v519 = vshrl.u32 %v518, 7
        %v520 = vsub.s32 0, %v519
        %v521 = vrot.slane %v516, %v520
        %v539 = vunpack.c.l.b16 %v500
        %v540 = vunpack.c.l.b16 %v501
        %v541 = vunpack.c.l.b16 %v502
        %v542 = vunpack.c.l.b16 %v503
        %v543 = vunpack.c.l.b16 %v504
        %v544 = vunpack.c.l.b16 %v505
        %v545 = vunpack.c.l.b16 %v506
        %v546 = vunpack.c.l.b16 %v507
        %v547 = vunpack.c.l.b16 %v508
        %v548 = vunpack.c.l.b16 %v509
        %v549 = vunpack.c.l.b16 %v510
        %v550 = vunpack.c.l.b16 %v511
        %v551 = vunpack.c.l.b16 %v512
        %v552 = vunpack.c.l.b16 %v513
        %v553 = vunpack.c.l.b16 %v514
        %v554 = vunpack.c.l.b16 %v515
        %v555 = vpack.c.b16 %v540, %v539
        %v556 = vpack.c.b16 %v542, %v541
        %v557 = vpack.c.b16 %v544, %v543
        %v558 = vpack.c.b16 %v546, %v545
        %v559 = vpack.c.b16 %v548, %v547
        %v560 = vpack.c.b16 %v550, %v549
        %v561 = vpack.c.b16 %v552, %v551
        %v562 = vpack.c.b16 %v554, %v553
        %571 = vmatprep.subr.bf16.mxu0 0
        %572 = vmatpush1.bf16.msra.mxu0 %v555
        %573 = vmatprep.subr.bf16.mxu0 0
        %574 = vmatpush1.bf16.msra.mxu0 %v556
        %575 = vmatprep.subr.bf16.mxu0 0
        %576 = vmatpush1.bf16.msra.mxu0 %v557
        %577 = vmatprep.subr.bf16.mxu0 0
        %578 = vmatpush1.bf16.msra.mxu0 %v558
        %579 = vmatprep.subr.bf16.mxu0 0
        %580 = vmatpush1.bf16.msra.mxu0 %v559
        %581 = vmatprep.subr.bf16.mxu0 0
        %582 = vmatpush1.bf16.msra.mxu0 %v560
        %583 = vmatprep.subr.bf16.mxu0 0
        %584 = vmatpush1.bf16.msra.mxu0 %v561
        %585 = vmatprep.subr.bf16.mxu0 0
        %586 = vmatpush1.bf16.msra.mxu0 %v562
        %587 = vmatprep.subr.bf16.mxu0 0
        %588 = vmatpush1.bf16.msra.mxu0 0
        %589 = vmatprep.subr.bf16.mxu0 0
        %590 = vmatpush1.bf16.msra.mxu0 0
        %591 = vmatprep.subr.bf16.mxu0 0
        %592 = vmatpush1.bf16.msra.mxu0 0
        %593 = vmatprep.subr.bf16.mxu0 0
        %594 = vmatpush1.bf16.msra.mxu0 0
        %595 = vmatprep.subr.bf16.mxu0 0
        %596 = vmatpush1.bf16.msra.mxu0 0
        %597 = vmatprep.subr.bf16.mxu0 0
        %598 = vmatpush1.bf16.msra.mxu0 0
        %599 = vmatprep.subr.bf16.mxu0 0
        %600 = vmatpush1.bf16.msra.mxu0 0
        %601 = vmatprep.subr.bf16.mxu0 0
        %602 = vmatpush1.bf16.msra.mxu0 0
        %603 = vmatprep.mubr.bf16.mxu0 0
        %604 = vmatmul.mubr.bf16.gmra.mrb[0].mxu0 %v499
        %v605 = vpop.f32.mrb[0].mxu0
        %v606 = vadd.f32 %v521, %v605
        %v607 = vpop.f32.mrb[0].mxu0
        %v608 = vpop.f32.mrb[0].mxu0
        %v609 = vpop.f32.mrb[0].mxu0
        %610 = vdwg.mxu0
        %611 = vst [vmem:[%s268] sm:$0xff] %v606
        %s612 = sand.u32 %s141, 1
        %s613 = scalar_lea.sflag [#allocation4], %s612
        %s614 = sand.u32 %s141, 1
        %s615 = smul.addr %s614, 8
        %s616 = scalar_lea.vmem [#allocation8], %s615
        // Predicated region
        $region53: #{tpu_custom_call.1} parent=39 // pred_check
          %p617 = pneg %p151
        $region54: #{tpu_custom_call.1} parent=39 // pred_check_branch
          %619 = sbr.rel (%p617) target = $region56
        $region55: #{tpu_custom_call.1} parent=39 // pred_region
          %s621 = ssub.s32 128, 128
          %622 = vsyncadd %s613, %s621
          %s623 = smul.addr %s23, 128
          %s624 = scalar_lea.hbm %s5, %s623
          %s626 = sshll.u32 %s616, 4
          %s627 = int_to_ptr.vmem [resolvable:$true] %s626
          %629 = dma.vmem_to_hbm [thread:$0]  %s627, 128, %s624, %s613
        $region56: #{tpu_custom_call.1} parent=39 // pred_fallthru
          _
      $region40: #{tpu_custom_call.1} parent=5 // pred_fallthru
        _
      %p630 = scmp.le.s32.totalorder 2, %s18
      // Predicated region
      $region57: #{tpu_custom_call.1} parent=5 // pred_check
        %p631 = pneg %p630
      $region58: #{tpu_custom_call.1} parent=5 // pred_check_branch
        %633 = sbr.rel (%p631) target = $region60
      $region59: #{tpu_custom_call.1} parent=5 // pred_region
        %s634 = ssub.s32 %s18, 2
        // Predicated region
        $region61: #{tpu_custom_call.1} parent=59 // pred_check
          %p635 = pneg %p157
        $region62: #{tpu_custom_call.1} parent=59 // pred_check_branch
          %637 = sbr.rel (%p635) target = $region64
        $region63: #{tpu_custom_call.1} parent=59 // pred_region
          %s638 = sand.u32 %s142, 1
          %s639 = scalar_lea.sflag [#allocation4], %s638
          %s640 = sand.u32 %s142, 1
          %s641 = smul.addr %s640, 8
          %s642 = scalar_lea.vmem [#allocation8], %s641
          %643 = dma.done %s639, 128
        $region64: #{tpu_custom_call.1} parent=59 // pred_fallthru
          _
      $region60: #{tpu_custom_call.1} parent=5 // pred_fallthru
        _
    $region6: #{tpu_custom_call.1} parent=1 // loop_footer
      %s22 = sadd.s32 1, %s18
    $region7: #{tpu_custom_call.1} parent=1 // loop_footer_branch
      %17 = sbr.rel target = $region3
    $region8: #{tpu_custom_call.1} parent=1 // loop_exit
      _
    %644 = vsyncpa [#allocation3], 1
    %s645 = scalar_lea.sflag [#allocation3], 1
    %646 = vsyncpa %s645, 1
    %647 = vsyncpa [#allocation6], 1
    %648 = vsyncpa [#allocation4], 1
    %s649 = scalar_lea.sflag [#allocation4], 1
    %650 = vsyncpa %s649, 1

// kernel: tpu_custom_call.1
$region0: #{tpu_custom_call.1}
  #allocation0 [shape = 'u32[]', space=smem, size = 0x4, offset = 0x4, fixed_abs, tag = 'smem constant byte address 0x4 - core index']
  #allocation1 [shape = 'u32[144,128]{1,0:T(1,128)}', space=vmem, size = 0x12000, scoped, tag = 'internal scratch']
  %s0 = inlined_call_operand.hbm [shape: f32[16,128], index: 0, kind: input, shape index: {}]
  %s1 = inlined_call_operand.hbm [shape: bf16[2,128,128], index: 1, kind: input, shape index: {}]
  %s2 = inlined_call_operand.vmem [shape: f32[2,1,128], index: 2, kind: input, shape index: {}]
  %s3 = inlined_call_operand.hbm [shape: bf16[128,128], index: 3, kind: input, shape index: {}]
  %s4 = inlined_call_operand.vmem [shape: f32[1,128], index: 4, kind: input, shape index: {}]
  %s5 = inlined_call_operand.hbm [shape: f32[16,128], index: 5, kind: output, shape index: {}]
  %s6 = sld [smem:[#allocation0]]
  $region65: #{tpu_custom_call.1} parent=0
    _
  %s8 = ssub.s32 1, %s6
  %s9 = scalar_select 0, %s8, %s6
  $region1: #{tpu_custom_call.1} parent=0
    #allocation2 [shape = 'u8[8192]{0}', space=vmem, size = 0x2000, scoped, tag = 'input window, operand 0']
    #allocation3 [shape = 's32[2]{0}', space=sflag, size = 0x8, scoped, tag = 'scoped memory for tpu_custom_call.1']
    #allocation4 [shape = 's32[2]{0}', space=sflag, size = 0x8, scoped, tag = 'scoped memory for tpu_custom_call.1']
    #allocation5 [shape = 'u8[65536]{0}', space=vmem, size = 0x10000, scoped, tag = 'input window, operand 1, single buffered']
    #allocation6 [shape = 's32[1]{0}', space=sflag, size = 0x4, scoped, tag = 'scoped memory for tpu_custom_call.1']
    #allocation7 [shape = 'u8[32768]{0}', space=vmem, size = 0x8000, scoped, tag = 'input window, operand 3, single buffered']
    #allocation8 [shape = 'u8[8192]{0}', space=vmem, size = 0x2000, scoped, tag = 'output window, operand 0']
    %10 = vsyncpa [#allocation3], 0
    %s11 = scalar_lea.sflag [#allocation3], 1
    %12 = vsyncpa %s11, 0
    %13 = vsyncpa [#allocation6], 0
    %14 = vsyncpa [#allocation4], 0
    %s15 = scalar_lea.sflag [#allocation4], 1
    %16 = vsyncpa %s15, 0
    loop: start=0, step=1, limit=4
    $region2: #{tpu_custom_call.1} parent=1 // loop_pre_header
      _
    $region3: #{tpu_custom_call.1} parent=1 // loop_header
      %s18 = sphi 0, %s22
      %p19 = scmp.ge.s32.totalorder %s18, 4
      %s28 = sphi 0, %s30
      %s31 = sphi 0, %s28
      %s32 = sphi 0, %s31
      %s48 = sphi 0, %s32
      %s52 = sphi 0, %s52
      %s54 = sphi 0, %s52
      %s55 = sphi 0, %s54
      %s69 = sphi 0, %s55
      %s73 = sphi 0, %s73
      %s75 = sphi 0, %s73
      %s76 = sphi 0, %s75
      %s90 = sphi 0, %s76
      %s94 = sphi 0, %s94
      %s96 = sphi 0, %s94
      %s97 = sphi 0, %s96
      %s111 = sphi 0, %s97
      %s115 = sphi 0, %s115
      %s117 = sphi 0, %s115
      %s118 = sphi 0, %s117
      %s132 = sphi 0, %s118
      %s138 = sphi 0, %s140
      %s141 = sphi 0, %s138
      %s142 = sphi 0, %s141
      %s158 = sphi 0, %s142
    $region4: #{tpu_custom_call.1} parent=1 // loop_header_branch
      %21 = sbr.rel (%p19) target = $region8
    $region5: #{tpu_custom_call.1} parent=1 // loop_body
      %s23 = ssub.s32 %s18, 1
      %s24 = ssub.s32 %s18, 2
      %s25 = sadd.s32 %s18, 1
      %s26 = ssub.s32 %s18, %s25
      %p27 = scmp.eq.s32.totalorder %s26, 0
      %s29 = sadd.s32 %s28, 1
      %s30 = scalar_select %p27, %s28, %s29
      %p33 = pneg %p27
      %p34 = scmp.eq.s32.totalorder %s18, 1
      %p35 = por %p33, %p34
      %p36 = scmp.ne.s32.totalorder %s28, %s31
      %p37 = scmp.eq.s32.totalorder %s18, 0
      %p38 = por %p36, %p37
      %p39 = scmp.ne.s32.totalorder %s28, %s31
      %p40 = scmp.eq.s32.totalorder %s23, 1
      %p41 = por %p39, %p40
      %p42 = scmp.ne.s32.totalorder %s31, %s32
      %p43 = scmp.eq.s32.totalorder %s23, 0
      %p44 = por %p42, %p43
      %p45 = scmp.ne.s32.totalorder %s31, %s32
      %p46 = scmp.eq.s32.totalorder %s24, 1
      %p47 = por %p45, %p46
      %p49 = scmp.ne.s32.totalorder %s32, %s48
      %p50 = scmp.eq.s32.totalorder %s24, 0
      %p51 = por %p49, %p50
      %s53 = sadd.s32 %s52, 1
      %p56 = scmp.eq.s32.totalorder %s18, 1
      %p57 = scmp.ne.s32.totalorder %s52, %s54
      %p58 = scmp.eq.s32.totalorder %s18, 0
      %p59 = por %p57, %p58
      %p60 = scmp.ne.s32.totalorder %s52, %s54
      %p61 = scmp.eq.s32.totalorder %s23, 1
      %p62 = por %p60, %p61
      %p63 = scmp.ne.s32.totalorder %s54, %s55
      %p64 = scmp.eq.s32.totalorder %s23, 0
      %p65 = por %p63, %p64
      %p66 = scmp.ne.s32.totalorder %s54, %s55
      %p67 = scmp.eq.s32.totalorder %s24, 1
      %p68 = por %p66, %p67
      %p70 = scmp.ne.s32.totalorder %s55, %s69
      %p71 = scmp.eq.s32.totalorder %s24, 0
      %p72 = por %p70, %p71
      %s74 = sadd.s32 %s73, 1
      %p77 = scmp.eq.s32.totalorder %s18, 1
      %p78 = scmp.ne.s32.totalorder %s73, %s75
      %p79 = scmp.eq.s32.totalorder %s18, 0
      %p80 = por %p78, %p79
      %p81 = scmp.ne.s32.totalorder %s73, %s75
      %p82 = scmp.eq.s32.totalorder %s23, 1
      %p83 = por %p81, %p82
      %p84 = scmp.ne.s32.totalorder %s75, %s76
      %p85 = scmp.eq.s32.totalorder %s23, 0
      %p86 = por %p84, %p85
      %p87 = scmp.ne.s32.totalorder %s75, %s76
      %p88 = scmp.eq.s32.totalorder %s24, 1
      %p89 = por %p87, %p88
      %p91 = scmp.ne.s32.totalorder %s76, %s90
      %p92 = scmp.eq.s32.totalorder %s24, 0
      %p93 = por %p91, %p92
      %s95 = sadd.s32 %s94, 1
      %p98 = scmp.eq.s32.totalorder %s18, 1
      %p99 = scmp.ne.s32.totalorder %s94, %s96
      %p100 = scmp.eq.s32.totalorder %s18, 0
      %p101 = por %p99, %p100
      %p102 = scmp.ne.s32.totalorder %s94, %s96
      %p103 = scmp.eq.s32.totalorder %s23, 1
      %p104 = por %p102, %p103
      %p105 = scmp.ne.s32.totalorder %s96, %s97
      %p106 = scmp.eq.s32.totalorder %s23, 0
      %p107 = por %p105, %p106
      %p108 = scmp.ne.s32.totalorder %s96, %s97
      %p109 = scmp.eq.s32.totalorder %s24, 1
      %p110 = por %p108, %p109
      %p112 = scmp.ne.s32.totalorder %s97, %s111
      %p113 = scmp.eq.s32.totalorder %s24, 0
      %p114 = por %p112, %p113
      %s116 = sadd.s32 %s115, 1
      %p119 = scmp.eq.s32.totalorder %s18, 1
      %p120 = scmp.ne.s32.totalorder %s115, %s117
      %p121 = scmp.eq.s32.totalorder %s18, 0
      %p122 = por %p120, %p121
      %p123 = scmp.ne.s32.totalorder %s115, %s117
      %p124 = scmp.eq.s32.totalorder %s23, 1
      %p125 = por %p123, %p124
      %p126 = scmp.ne.s32.totalorder %s117, %s118
      %p127 = scmp.eq.s32.totalorder %s23, 0
      %p128 = por %p126, %p127
      %p129 = scmp.ne.s32.totalorder %s117, %s118
      %p130 = scmp.eq.s32.totalorder %s24, 1
      %p131 = por %p129, %p130
      %p133 = scmp.ne.s32.totalorder %s118, %s132
      %p134 = scmp.eq.s32.totalorder %s24, 0
      %p135 = por %p133, %p134
      %s136 = ssub.s32 %s18, %s25
      %p137 = scmp.eq.s32.totalorder %s136, 0
      %s139 = sadd.s32 %s138, 1
      %s140 = scalar_select %p137, %s138, %s139
      %p143 = pneg %p137
      %p144 = scmp.eq.s32.totalorder %s18, 1
      %p145 = por %p143, %p144
      %p146 = scmp.ne.s32.totalorder %s138, %s141
      %p147 = scmp.eq.s32.totalorder %s18, 0
      %p148 = por %p146, %p147
      %p149 = scmp.ne.s32.totalorder %s138, %s141
      %p150 = scmp.eq.s32.totalorder %s23, 1
      %p151 = por %p149, %p150
      %p152 = scmp.ne.s32.totalorder %s141, %s142
      %p153 = scmp.eq.s32.totalorder %s23, 0
      %p154 = por %p152, %p153
      %p155 = scmp.ne.s32.totalorder %s141, %s142
      %p156 = scmp.eq.s32.totalorder %s24, 1
      %p157 = por %p155, %p156
      %p159 = scmp.ne.s32.totalorder %s142, %s158
      %p160 = scmp.eq.s32.totalorder %s24, 0
      %p161 = por %p159, %p160
      %p162 = scmp.le.s32.totalorder 1, %s18
      %p163 = scmp.lt.s32.totalorder %s18, 3
      %p164 = pnand %p162, %p163
      %p165 = pneg %p164
      // Predicated region
      $region9: #{tpu_custom_call.1} parent=5 // pred_check
        _
      $region10: #{tpu_custom_call.1} parent=5 // pred_check_branch
        %167 = sbr.rel (%p164) target = $region12
      $region11: #{tpu_custom_call.1} parent=5 // pred_region
        %s168 = ssub.s32 %s18, 1
        // Predicated region
        $region13: #{tpu_custom_call.1} parent=11 // pred_check
          %p169 = pneg %p65
        $region14: #{tpu_custom_call.1} parent=11 // pred_check_branch
          %171 = sbr.rel (%p169) target = $region16
        $region15: #{tpu_custom_call.1} parent=11 // pred_region
          %s173 = ssub.s32 2048, 2048
          %174 = vsyncadd [#allocation6], %s173
          %s175 = sshll.u32 [#allocation5], 4
          %s176 = int_to_ptr.vmem [resolvable:$true] %s175
          %181 = dma.hbm_to_vmem [thread:$0]  %s1, 2048, %s176, [#allocation6], 64, 64, 4
        $region16: #{tpu_custom_call.1} parent=11 // pred_fallthru
          _
        // Predicated region
        $region17: #{tpu_custom_call.1} parent=11 // pred_check
          %p182 = pneg %p86
        $region18: #{tpu_custom_call.1} parent=11 // pred_check_branch
          %184 = sbr.rel (%p182) target = $region20
        $region19: #{tpu_custom_call.1} parent=11 // pred_region
          _
        $region20: #{tpu_custom_call.1} parent=11 // pred_fallthru
          _
        // Predicated region
        $region21: #{tpu_custom_call.1} parent=11 // pred_check
          %p185 = pneg %p107
        $region22: #{tpu_custom_call.1} parent=11 // pred_check_branch
          %187 = sbr.rel (%p185) target = $region24
        $region23: #{tpu_custom_call.1} parent=11 // pred_region
          %s189 = ssub.s32 1024, 1024
          %190 = vsyncadd [#allocation6], %s189
          %s191 = sshll.u32 [#allocation7], 4
          %s192 = int_to_ptr.vmem [resolvable:$true] %s191
          %197 = dma.hbm_to_vmem [thread:$0]  %s3, 1024, %s192, [#allocation6], 64, 64, 4
        $region24: #{tpu_custom_call.1} parent=11 // pred_fallthru
          _
        // Predicated region
        $region25: #{tpu_custom_call.1} parent=11 // pred_check
          %p198 = pneg %p128
        $region26: #{tpu_custom_call.1} parent=11 // pred_check_branch
          %200 = sbr.rel (%p198) target = $region28
        $region27: #{tpu_custom_call.1} parent=11 // pred_region
          _
        $region28: #{tpu_custom_call.1} parent=11 // pred_fallthru
          _
      $region12: #{tpu_custom_call.1} parent=5 // pred_fallthru
        _
      %p201 = scmp.lt.s32.totalorder %s18, 2
      // Predicated region
      $region29: #{tpu_custom_call.1} parent=5 // pred_check
        %p202 = pneg %p201
      $region30: #{tpu_custom_call.1} parent=5 // pred_check_branch
        %204 = sbr.rel (%p202) target = $region32
      $region31: #{tpu_custom_call.1} parent=5 // pred_region
        // Predicated region
        $region33: #{tpu_custom_call.1} parent=31 // pred_check
          %p205 = pneg %p38
        $region34: #{tpu_custom_call.1} parent=31 // pred_check_branch
          %207 = sbr.rel (%p205) target = $region36
        $region35: #{tpu_custom_call.1} parent=31 // pred_region
          %s208 = sand.u32 %s28, 1
          %s209 = scalar_lea.sflag [#allocation3], %s208
          %s210 = sand.u32 %s28, 1
          %s211 = smul.addr %s210, 8
          %s212 = scalar_lea.vmem [#allocation2], %s211
          %s214 = ssub.s32 128, 128
          %215 = vsyncadd %s209, %s214
          %s216 = smul.addr %s18, 128
          %s217 = scalar_lea.hbm %s0, %s216
          %s219 = sshll.u32 %s212, 4
          %s220 = int_to_ptr.vmem [resolvable:$true] %s219
          %222 = dma.hbm_to_vmem [thread:$0]  %s217, 128, %s220, %s209
        $region36: #{tpu_custom_call.1} parent=31 // pred_fallthru
          _
      $region32: #{tpu_custom_call.1} parent=5 // pred_fallthru
        _
      %p223 = scmp.le.s32.totalorder 1, %s18
      %p224 = scmp.lt.s32.totalorder %s18, 3
      %p225 = pnand %p223, %p224
      %p226 = pneg %p225
      // Predicated region
      $region37: #{tpu_custom_call.1} parent=5 // pred_check
        _
      $region38: #{tpu_custom_call.1} parent=5 // pred_check_branch
        %228 = sbr.rel (%p225) target = $region40
      $region39: #{tpu_custom_call.1} parent=5 // pred_region
        %s229 = ssub.s32 %s18, 1
        %s230 = sand.u32 %s31, 1
        %s231 = scalar_lea.sflag [#allocation3], %s230
        %s232 = sand.u32 %s31, 1
        %s233 = smul.addr %s232, 8
        %s234 = scalar_lea.vmem [#allocation2], %s233
        // Predicated region
        $region41: #{tpu_custom_call.1} parent=39 // pred_check
          %p235 = pneg %p44
        $region42: #{tpu_custom_call.1} parent=39 // pred_check_branch
          %237 = sbr.rel (%p235) target = $region44
        $region43: #{tpu_custom_call.1} parent=39 // pred_region
          %238 = dma.done %s231, 128
        $region44: #{tpu_custom_call.1} parent=39 // pred_fallthru
          _
        // Predicated region
        $region45: #{tpu_custom_call.1} parent=39 // pred_check
          %p239 = pneg %p65
        $region46: #{tpu_custom_call.1} parent=39 // pred_check_branch
          %241 = sbr.rel (%p239) target = $region48
        $region47: #{tpu_custom_call.1} parent=39 // pred_region
          %242 = dma.done [#allocation6], 2048
        $region48: #{tpu_custom_call.1} parent=39 // pred_fallthru
          _
        // Predicated region
        $region49: #{tpu_custom_call.1} parent=39 // pred_check
          %p243 = pneg %p107
        $region50: #{tpu_custom_call.1} parent=39 // pred_check_branch
          %245 = sbr.rel (%p243) target = $region52
        $region51: #{tpu_custom_call.1} parent=39 // pred_region
          %246 = dma.done [#allocation6], 1024
        $region52: #{tpu_custom_call.1} parent=39 // pred_fallthru
          _
        %s247 = sand.u32 %s31, 1
        %s248 = scalar_lea.sflag [#allocation3], %s247
        %s249 = sand.u32 %s31, 1
        %s250 = smul.addr %s249, 8
        %s251 = scalar_lea.vmem [#allocation2], %s250
        %p252 = pneg %p44
        %p253 = pneg %p41
        %p254 = pneg %p65
        %p255 = pneg %p62
        %p256 = pneg %p86
        %p257 = pneg %p83
        %p258 = pneg %p107
        %p259 = pneg %p104
        %p260 = pneg %p128
        %p261 = pneg %p125
        %p262 = pneg %p154
        %p263 = pneg %p151
        %s264 = sand.u32 %s141, 1
        %s265 = scalar_lea.sflag [#allocation4], %s264
        %s266 = sand.u32 %s141, 1
        %s267 = smul.addr %s266, 8
        %s268 = scalar_lea.vmem [#allocation8], %s267
        %v270 = vld [vmem:[%s234] sm:$0xff]
        %v271 = vpack.c.bf16 %v270, %v270
        %v272 = vld [vmem:[#allocation5] sm:$0xf]
        %v273 = vld [vmem:[#allocation5 + $0x4] sm:$0xf]
        %v274 = vld [vmem:[#allocation5 + $0x8] sm:$0xf]
        %v275 = vld [vmem:[#allocation5 + $0xc] sm:$0xf]
        %v276 = vld [vmem:[#allocation5 + $0x10] sm:$0xf]
        %v277 = vld [vmem:[#allocation5 + $0x14] sm:$0xf]
        %v278 = vld [vmem:[#allocation5 + $0x18] sm:$0xf]
        %v279 = vld [vmem:[#allocation5 + $0x1c] sm:$0xf]
        %v280 = vld [vmem:[#allocation5 + $0x20] sm:$0xf]
        %v281 = vld [vmem:[#allocation5 + $0x24] sm:$0xf]
        %v282 = vld [vmem:[#allocation5 + $0x28] sm:$0xf]
        %v283 = vld [vmem:[#allocation5 + $0x2c] sm:$0xf]
        %v284 = vld [vmem:[#allocation5 + $0x30] sm:$0xf]
        %v285 = vld [vmem:[#allocation5 + $0x34] sm:$0xf]
        %v286 = vld [vmem:[#allocation5 + $0x38] sm:$0xf]
        %v287 = vld [vmem:[#allocation5 + $0x3c] sm:$0xf]
        %v288 = vld [vmem:[%s2] sm:$0x1]
        %v290 = vlaneseq
        %v291 = vshrl.u32 %v290, 7
        %v292 = vsub.s32 0, %v291
        %v293 = vrot.slane %v288, %v292
        %v311 = vunpack.c.l.b16 %v272
        %v312 = vunpack.c.l.b16 %v273
        %v313 = vunpack.c.l.b16 %v274
        %v314 = vunpack.c.l.b16 %v275
        %v315 = vunpack.c.l.b16 %v276
        %v316 = vunpack.c.l.b16 %v277
        %v317 = vunpack.c.l.b16 %v278
        %v318 = vunpack.c.l.b16 %v279
        %v319 = vunpack.c.l.b16 %v280
        %v320 = vunpack.c.l.b16 %v281
        %v321 = vunpack.c.l.b16 %v282
        %v322 = vunpack.c.l.b16 %v283
        %v323 = vunpack.c.l.b16 %v284
        %v324 = vunpack.c.l.b16 %v285
        %v325 = vunpack.c.l.b16 %v286
        %v326 = vunpack.c.l.b16 %v287
        %v327 = vpack.c.b16 %v312, %v311
        %v328 = vpack.c.b16 %v314, %v313
        %v329 = vpack.c.b16 %v316, %v315
        %v330 = vpack.c.b16 %v318, %v317
        %v331 = vpack.c.b16 %v320, %v319
        %v332 = vpack.c.b16 %v322, %v321
        %v333 = vpack.c.b16 %v324, %v323
        %v334 = vpack.c.b16 %v326, %v325
        %343 = vmatprep.subr.bf16.mxu0 0
        %344 = vmatpush1.bf16.msra.mxu0 %v327
        %345 = vmatprep.subr.bf16.mxu0 0
        %346 = vmatpush1.bf16.msra.mxu0 %v328
        %347 = vmatprep.subr.bf16.mxu0 0
        %348 = vmatpush1.bf16.msra.mxu0 %v329
        %349 = vmatprep.subr.bf16.mxu0 0
        %350 = vmatpush1.bf16.msra.mxu0 %v330
        %351 = vmatprep.subr.bf16.mxu0 0
        %352 = vmatpush1.bf16.msra.mxu0 %v331
        %353 = vmatprep.subr.bf16.mxu0 0
        %354 = vmatpush1.bf16.msra.mxu0 %v332
        %355 = vmatprep.subr.bf16.mxu0 0
        %356 = vmatpush1.bf16.msra.mxu0 %v333
        %357 = vmatprep.subr.bf16.mxu0 0
        %358 = vmatpush1.bf16.msra.mxu0 %v334
        %359 = vmatprep.subr.bf16.mxu0 0
        %360 = vmatpush1.bf16.msra.mxu0 0
        %361 = vmatprep.subr.bf16.mxu0 0
        %362 = vmatpush1.bf16.msra.mxu0 0
        %363 = vmatprep.subr.bf16.mxu0 0
        %364 = vmatpush1.bf16.msra.mxu0 0
        %365 = vmatprep.subr.bf16.mxu0 0
        %366 = vmatpush1.bf16.msra.mxu0 0
        %367 = vmatprep.subr.bf16.mxu0 0
        %368 = vmatpush1.bf16.msra.mxu0 0
        %369 = vmatprep.subr.bf16.mxu0 0
        %370 = vmatpush1.bf16.msra.mxu0 0
        %371 = vmatprep.subr.bf16.mxu0 0
        %372 = vmatpush1.bf16.msra.mxu0 0
        %373 = vmatprep.subr.bf16.mxu0 0
        %374 = vmatpush1.bf16.msra.mxu0 0
        %375 = vmatprep.mubr.bf16.mxu0 0
        %376 = vmatmul.mubr.bf16.gmra.mrb[0].mxu0 %v271
        %v377 = vpop.f32.mrb[0].mxu0
        %v378 = vadd.f32 %v293, %v377
        %v379 = vpop.f32.mrb[0].mxu0
        %v380 = vpop.f32.mrb[0].mxu0
        %v381 = vpop.f32.mrb[0].mxu0
        %382 = vdwg.mxu0
        %v383 = vmax.f32 %v378, 0.0
        %v384 = vpack.c.bf16 %v383, %v383
        %s385 = scalar_lea.vmem [#allocation5], 64
        %v386 = vld [vmem:[%s385] sm:$0xf]
        %v387 = vld [vmem:[%s385 + $0x4] sm:$0xf]
        %v388 = vld [vmem:[%s385 + $0x8] sm:$0xf]
        %v389 = vld [vmem:[%s385 + $0xc] sm:$0xf]
        %v390 = vld [vmem:[%s385 + $0x10] sm:$0xf]
        %v391 = vld [vmem:[%s385 + $0x14] sm:$0xf]
        %v392 = vld [vmem:[%s385 + $0x18] sm:$0xf]
        %v393 = vld [vmem:[%s385 + $0x1c] sm:$0xf]
        %v394 = vld [vmem:[%s385 + $0x20] sm:$0xf]
        %v395 = vld [vmem:[%s385 + $0x24] sm:$0xf]
        %v396 = vld [vmem:[%s385 + $0x28] sm:$0xf]
        %v397 = vld [vmem:[%s385 + $0x2c] sm:$0xf]
        %v398 = vld [vmem:[%s385 + $0x30] sm:$0xf]
        %v399 = vld [vmem:[%s385 + $0x34] sm:$0xf]
        %v400 = vld [vmem:[%s385 + $0x38] sm:$0xf]
        %v401 = vld [vmem:[%s385 + $0x3c] sm:$0xf]
        %s402 = scalar_lea.vmem %s2, 1
        %v403 = vld [vmem:[%s402] sm:$0x1]
        %v405 = vlaneseq
        %v406 = vshrl.u32 %v405, 7
        %v407 = vsub.s32 0, %v406
        %v408 = vrot.slane %v403, %v407
        %v426 = vunpack.c.l.b16 %v386
        %v427 = vunpack.c.l.b16 %v387
        %v428 = vunpack.c.l.b16 %v388
        %v429 = vunpack.c.l.b16 %v389
        %v430 = vunpack.c.l.b16 %v390
        %v431 = vunpack.c.l.b16 %v391
        %v432 = vunpack.c.l.b16 %v392
        %v433 = vunpack.c.l.b16 %v393
        %v434 = vunpack.c.l.b16 %v394
        %v435 = vunpack.c.l.b16 %v395
        %v436 = vunpack.c.l.b16 %v396
        %v437 = vunpack.c.l.b16 %v397
        %v438 = vunpack.c.l.b16 %v398
        %v439 = vunpack.c.l.b16 %v399
        %v440 = vunpack.c.l.b16 %v400
        %v441 = vunpack.c.l.b16 %v401
        %v442 = vpack.c.b16 %v427, %v426
        %v443 = vpack.c.b16 %v429, %v428
        %v444 = vpack.c.b16 %v431, %v430
        %v445 = vpack.c.b16 %v433, %v432
        %v446 = vpack.c.b16 %v435, %v434
        %v447 = vpack.c.b16 %v437, %v436
        %v448 = vpack.c.b16 %v439, %v438
        %v449 = vpack.c.b16 %v441, %v440
        %458 = vmatprep.subr.bf16.mxu0 0
        %459 = vmatpush1.bf16.msra.mxu0 %v442
        %460 = vmatprep.subr.bf16.mxu0 0
        %461 = vmatpush1.bf16.msra.mxu0 %v443
        %462 = vmatprep.subr.bf16.mxu0 0
        %463 = vmatpush1.bf16.msra.mxu0 %v444
        %464 = vmatprep.subr.bf16.mxu0 0
        %465 = vmatpush1.bf16.msra.mxu0 %v445
        %466 = vmatprep.subr.bf16.mxu0 0
        %467 = vmatpush1.bf16.msra.mxu0 %v446
        %468 = vmatprep.subr.bf16.mxu0 0
        %469 = vmatpush1.bf16.msra.mxu0 %v447
        %470 = vmatprep.subr.bf16.mxu0 0
        %471 = vmatpush1.bf16.msra.mxu0 %v448
        %472 = vmatprep.subr.bf16.mxu0 0
        %473 = vmatpush1.bf16.msra.mxu0 %v449
        %474 = vmatprep.subr.bf16.mxu0 0
        %475 = vmatpush1.bf16.msra.mxu0 0
        %476 = vmatprep.subr.bf16.mxu0 0
        %477 = vmatpush1.bf16.msra.mxu0 0
        %478 = vmatprep.subr.bf16.mxu0 0
        %479 = vmatpush1.bf16.msra.mxu0 0
        %480 = vmatprep.subr.bf16.mxu0 0
        %481 = vmatpush1.bf16.msra.mxu0 0
        %482 = vmatprep.subr.bf16.mxu0 0
        %483 = vmatpush1.bf16.msra.mxu0 0
        %484 = vmatprep.subr.bf16.mxu0 0
        %485 = vmatpush1.bf16.msra.mxu0 0
        %486 = vmatprep.subr.bf16.mxu0 0
        %487 = vmatpush1.bf16.msra.mxu0 0
        %488 = vmatprep.subr.bf16.mxu0 0
        %489 = vmatpush1.bf16.msra.mxu0 0
        %490 = vmatprep.mubr.bf16.mxu0 0
        %491 = vmatmul.mubr.bf16.gmra.mrb[0].mxu0 %v384
        %v492 = vpop.f32.mrb[0].mxu0
        %v493 = vadd.f32 %v408, %v492
        %v494 = vpop.f32.mrb[0].mxu0
        %v495 = vpop.f32.mrb[0].mxu0
        %v496 = vpop.f32.mrb[0].mxu0
        %497 = vdwg.mxu0
        %v498 = vmax.f32 %v493, 0.0
        %v499 = vpack.c.bf16 %v498, %v498
        %v500 = vld [vmem:[#allocation7] sm:$0xf]
        %v501 = vld [vmem:[#allocation7 + $0x4] sm:$0xf]
        %v502 = vld [vmem:[#allocation7 + $0x8] sm:$0xf]
        %v503 = vld [vmem:[#allocation7 + $0xc] sm:$0xf]
        %v504 = vld [vmem:[#allocation7 + $0x10] sm:$0xf]
        %v505 = vld [vmem:[#allocation7 + $0x14] sm:$0xf]
        %v506 = vld [vmem:[#allocation7 + $0x18] sm:$0xf]
        %v507 = vld [vmem:[#allocation7 + $0x1c] sm:$0xf]
        %v508 = vld [vmem:[#allocation7 + $0x20] sm:$0xf]
        %v509 = vld [vmem:[#allocation7 + $0x24] sm:$0xf]
        %v510 = vld [vmem:[#allocation7 + $0x28] sm:$0xf]
        %v511 = vld [vmem:[#allocation7 + $0x2c] sm:$0xf]
        %v512 = vld [vmem:[#allocation7 + $0x30] sm:$0xf]
        %v513 = vld [vmem:[#allocation7 + $0x34] sm:$0xf]
        %v514 = vld [vmem:[#allocation7 + $0x38] sm:$0xf]
        %v515 = vld [vmem:[#allocation7 + $0x3c] sm:$0xf]
        %v516 = vld [vmem:[%s4] sm:$0x1]
        %v518 = vlaneseq
        %v519 = vshrl.u32 %v518, 7
        %v520 = vsub.s32 0, %v519
        %v521 = vrot.slane %v516, %v520
        %v539 = vunpack.c.l.b16 %v500
        %v540 = vunpack.c.l.b16 %v501
        %v541 = vunpack.c.l.b16 %v502
        %v542 = vunpack.c.l.b16 %v503
        %v543 = vunpack.c.l.b16 %v504
        %v544 = vunpack.c.l.b16 %v505
        %v545 = vunpack.c.l.b16 %v506
        %v546 = vunpack.c.l.b16 %v507
        %v547 = vunpack.c.l.b16 %v508
        %v548 = vunpack.c.l.b16 %v509
        %v549 = vunpack.c.l.b16 %v510
        %v550 = vunpack.c.l.b16 %v511
        %v551 = vunpack.c.l.b16 %v512
        %v552 = vunpack.c.l.b16 %v513
        %v553 = vunpack.c.l.b16 %v514
        %v554 = vunpack.c.l.b16 %v515
        %v555 = vpack.c.b16 %v540, %v539
        %v556 = vpack.c.b16 %v542, %v541
        %v557 = vpack.c.b16 %v544, %v543
        %v558 = vpack.c.b16 %v546, %v545
        %v559 = vpack.c.b16 %v548, %v547
        %v560 = vpack.c.b16 %v550, %v549
        %v561 = vpack.c.b16 %v552, %v551
        %v562 = vpack.c.b16 %v554, %v553
        %571 = vmatprep.subr.bf16.mxu0 0
        %572 = vmatpush1.bf16.msra.mxu0 %v555
        %573 = vmatprep.subr.bf16.mxu0 0
        %574 = vmatpush1.bf16.msra.mxu0 %v556
        %575 = vmatprep.subr.bf16.mxu0 0
        %576 = vmatpush1.bf16.msra.mxu0 %v557
        %577 = vmatprep.subr.bf16.mxu0 0
        %578 = vmatpush1.bf16.msra.mxu0 %v558
        %579 = vmatprep.subr.bf16.mxu0 0
        %580 = vmatpush1.bf16.msra.mxu0 %v559
        %581 = vmatprep.subr.bf16.mxu0 0
        %582 = vmatpush1.bf16.msra.mxu0 %v560
        %583 = vmatprep.subr.bf16.mxu0 0
        %584 = vmatpush1.bf16.msra.mxu0 %v561
        %585 = vmatprep.subr.bf16.mxu0 0
        %586 = vmatpush1.bf16.msra.mxu0 %v562
        %587 = vmatprep.subr.bf16.mxu0 0
        %588 = vmatpush1.bf16.msra.mxu0 0
        %589 = vmatprep.subr.bf16.mxu0 0
        %590 = vmatpush1.bf16.msra.mxu0 0
        %591 = vmatprep.subr.bf16.mxu0 0
        %592 = vmatpush1.bf16.msra.mxu0 0
        %593 = vmatprep.subr.bf16.mxu0 0
        %594 = vmatpush1.bf16.msra.mxu0 0
        %595 = vmatprep.subr.bf16.mxu0 0
        %596 = vmatpush1.bf16.msra.mxu0 0
        %597 = vmatprep.subr.bf16.mxu0 0
        %598 = vmatpush1.bf16.msra.mxu0 0
        %599 = vmatprep.subr.bf16.mxu0 0
        %600 = vmatpush1.bf16.msra.mxu0 0
        %601 = vmatprep.subr.bf16.mxu0 0
        %602 = vmatpush1.bf16.msra.mxu0 0
        %603 = vmatprep.mubr.bf16.mxu0 0
        %604 = vmatmul.mubr.bf16.gmra.mrb[0].mxu0 %v499
        %v605 = vpop.f32.mrb[0].mxu0
        %v606 = vadd.f32 %v521, %v605
        %v607 = vpop.f32.mrb[0].mxu0
        %v608 = vpop.f32.mrb[0].mxu0
        %v609 = vpop.f32.mrb[0].mxu0
        %610 = vdwg.mxu0
        %611 = vst [vmem:[%s268] sm:$0xff] %v606
        %s612 = sand.u32 %s141, 1
        %s613 = scalar_lea.sflag [#allocation4], %s612
        %s614 = sand.u32 %s141, 1
        %s615 = smul.addr %s614, 8
        %s616 = scalar_lea.vmem [#allocation8], %s615
        // Predicated region
        $region53: #{tpu_custom_call.1} parent=39 // pred_check
          %p617 = pneg %p151
        $region54: #{tpu_custom_call.1} parent=39 // pred_check_branch
          %619 = sbr.rel (%p617) target = $region56
        $region55: #{tpu_custom_call.1} parent=39 // pred_region
          %s621 = ssub.s32 128, 128
          %622 = vsyncadd %s613, %s621
          %s623 = smul.addr %s23, 128
          %s624 = scalar_lea.hbm %s5, %s623
          %s626 = sshll.u32 %s616, 4
          %s627 = int_to_ptr.vmem [resolvable:$true] %s626
          %629 = dma.vmem_to_hbm [thread:$0]  %s627, 128, %s624, %s613
        $region56: #{tpu_custom_call.1} parent=39 // pred_fallthru
          _
      $region40: #{tpu_custom_call.1} parent=5 // pred_fallthru
        _
      %p630 = scmp.le.s32.totalorder 2, %s18
      // Predicated region
      $region57: #{tpu_custom_call.1} parent=5 // pred_check
        %p631 = pneg %p630
      $region58: #{tpu_custom_call.1} parent=5 // pred_check_branch
        %633 = sbr.rel (%p631) target = $region60
      $region59: #{tpu_custom_call.1} parent=5 // pred_region
        %s634 = ssub.s32 %s18, 2
        // Predicated region
        $region61: #{tpu_custom_call.1} parent=59 // pred_check
          %p635 = pneg %p157
        $region62: #{tpu_custom_call.1} parent=59 // pred_check_branch
          %637 = sbr.rel (%p635) target = $region64
        $region63: #{tpu_custom_call.1} parent=59 // pred_region
          %s638 = sand.u32 %s142, 1
          %s639 = scalar_lea.sflag [#allocation4], %s638
          %s640 = sand.u32 %s142, 1
          %s641 = smul.addr %s640, 8
          %s642 = scalar_lea.vmem [#allocation8], %s641
          %643 = dma.done %s639, 128
        $region64: #{tpu_custom_call.1} parent=59 // pred_fallthru
          _
      $region60: #{tpu_custom_call.1} parent=5 // pred_fallthru
        _
    $region6: #{tpu_custom_call.1} parent=1 // loop_footer
      %s22 = sadd.s32 1, %s18
    $region7: #{tpu_custom_call.1} parent=1 // loop_footer_branch
      %17 = sbr.rel target = $region3
    $region8: #{tpu_custom_call.1} parent=1 // loop_exit
      _
    %644 = vsyncpa [#allocation3], 1
    %s645 = scalar_lea.sflag [#allocation3], 1
    %646 = vsyncpa %s645, 1
    %647 = vsyncpa [#allocation6], 1
    %648 = vsyncpa [#allocation4], 1
    %s649 = scalar_lea.sflag [#allocation4], 1
    %650 = vsyncpa %s649, 1

</llo_original>
